<compile_context>
chip_gen: v6e
topology: v6e:2x2x1
jax: 0.10.0
libtpu: 0.0.40
codegen_flags: <defaults>
</compile_context>

<pallas_src>
import jax
import jax.numpy as jnp
from jax import lax
from jax.experimental import pallas as pl
from jax.experimental.pallas import tpu as pltpu


_TIME_BLOCK = 128    # timesteps processed per grid step (partial unroll in-kernel)
_BATCH_BLOCK = 128   # lane-dense batch tile


def _round_up(x, m):
    return ((x + m - 1) // m) * m


# ----------------------------------------------------------------------------
# Pallas kernels
# ----------------------------------------------------------------------------
def _crf_forward_alg_kernel(emis_ref, mask_ref, start_ref, end_ref, trans_ref,
                            logz_ref, alpha_ref):
    """Log-partition recursion over one (TT, K, TB) emissions tile.

    emis_ref : (TT, K, TB)  input dtype (cast to f32 in-kernel), emis[t, j, b]
    mask_ref : (TT, 1, TB)  caller dtype (compared against 0 in-kernel)
    start_ref: (K, 1)       f32
    end_ref  : (K, 1)       f32
    trans_ref: (K, K, 1)    f32   trans_ref[j, k, 0] = transitions[j -> k]
    logz_ref : (1, TB)      f32   output (written on the last time block)
    alpha_ref: (K, TB)      f32   scratch accumulator, alpha[j, b]
    """
    TT, K, TB = emis_ref.shape
    tc = pl.program_id(1)
    nt = pl.num_programs(1)

    @pl.when(tc == 0)
    def _init():
        alpha_ref[...] = jnp.broadcast_to(start_ref[...], (K, TB))

    # ---- hoisted, loop-invariant per grid step (broadcast_in_dim is not CSE'd)
    trans_all = trans_ref[...]                             # (K_src, K_dst, 1)
    colmax = trans_all[0]                                  # (K_dst, 1)
    for j in range(1, K):
        colmax = jnp.maximum(colmax, trans_all[j])
    colmax_b = jnp.broadcast_to(colmax, (K, TB))
    # expT[j][k, b] = exp(trans[j, k] - colmax[k])  (<= 1; K tiny exps/grid step)
    expT = [jnp.broadcast_to(jnp.exp(trans_all[j] - colmax), (K, TB))
            for j in range(K)]

    def step(lt, alpha):
        emit = emis_ref[lt].astype(jnp.float32)            # (K_src, TB)
        a = alpha + emit                                   # a[j, b]
        # logsumexp_j(a[j,b] + trans[j,k]) with per-lane max + hoisted colmax:
        # only ONE exp + ONE log per timestep hit the EUP.
        m1 = jnp.max(a, axis=0, keepdims=True)             # (1, TB)
        e = jnp.exp(a - m1)                                # (K_src, TB), 1 exp
        acc = e[0:1, :] * expT[0]                          # (K_dst, TB)
        for j in range(1, K):
            acc = acc + e[j:j + 1, :] * expT[j]
        # acc >= exp(min_k(trans[j*,k]-colmax[k])) > 0 for the argmax row j*,
        # so log(acc) is safe for moderate transition dynamic range.
        nxt = m1 + colmax_b + jnp.log(acc)                 # (K_dst, TB), 1 log
        msk = mask_ref[lt]                                 # (1, TB)
        return jnp.where(msk != 0, nxt, alpha)

    alpha_ref[...] = lax.fori_loop(0, TT, step, alpha_ref[...], unroll=8)

    @pl.when(tc == nt - 1)
    def _finalize():
        final = alpha_ref[...] + end_ref[...]              # (K, TB)
        m = jnp.max(final, axis=0, keepdims=True)          # (1, TB)
        logz_ref[...] = m + jnp.log(
            jnp.sum(jnp.exp(final - m), axis=0, keepdims=True))


def _crf_viterbi_fwd_kernel(emis_ref, mask_ref, start_ref, end_ref, trans_ref,
                            score_out_ref, hist_ref, score_ref):
    """Viterbi forward recursion: running max scores + int8 backpointers.

    score_out_ref: (K, TB)      f32  final score + end_transitions
    hist_ref     : (TT, K, TB)  i8   hist[t, k, b] = best previous tag (K <= 127)
    score_ref    : (K, TB)      f32  scratch accumulator, score[k, b]
    """
    TT, K, TB = emis_ref.shape
    tc = pl.program_id(1)
    nt = pl.num_programs(1)

    @pl.when(tc == 0)
    def _init():
        score_ref[...] = (jnp.broadcast_to(start_ref[...], (K, TB))
                          + emis_ref[0].astype(jnp.float32))

    # ---- hoisted, loop-invariant per grid step
    trans_all = trans_ref[...]
    trans_b = [jnp.broadcast_to(trans_all[j], (K, TB)) for j in range(K)]
    idx_b = [jnp.full((K, TB), j, jnp.int32) for j in range(K)]

    def step(lt, score):
        t = tc * TT + lt                                   # global timestep
        emit = emis_ref[lt].astype(jnp.float32)            # (K_dst, TB)
        # Fused max+argmax over source tag j (single unrolled pass, VPU only).
        best_val = score[0:1, :] + trans_b[0] + emit
        best_idx = idx_b[0]
        for j in range(1, K):
            cand = score[j:j + 1, :] + trans_b[j] + emit
            better = cand > best_val
            best_val = jnp.where(better, cand, best_val)
            best_idx = jnp.where(better, idx_b[j], best_idx)
        # Backpointers are recorded even at masked steps (matches PyTorch);
        # int8 cuts the dominant HBM writeback stream 4x vs int32.
        hist_ref[lt] = best_idx.astype(jnp.int8)
        msk = mask_ref[lt]                                 # (1, TB)
        # t == 0 is the init step (no transition applied), like PyTorch.
        take = jnp.logical_and(msk != 0, t > 0)
        return jnp.where(take, best_val, score)

    score_ref[...] = lax.fori_loop(0, TT, step, score_ref[...], unroll=8)

    @pl.when(tc == nt - 1)
    def _finalize():
        score_out_ref[...] = score_ref[...] + end_ref[...]


# ----------------------------------------------------------------------------
# pallas_call plumbing
# ----------------------------------------------------------------------------
def _prep_inputs(emissions, masks, start, end, trans):
    B, T, K = emissions.shape
    TB = _BATCH_BLOCK
    B_pad = _round_up(B, TB)
    TT = min(_TIME_BLOCK, _round_up(T, 8))
    T_pad = _round_up(T, TT)
    # (B, T, K) -> (T, K, B): padded batch on the 128-lane axis (lane-dense).
    # allow_input_fusion lets XLA fold this transpose/pad into the pallas call.
    emis = jnp.transpose(emissions, (1, 2, 0))             # keep HBM dtype
    emis = jnp.pad(emis, ((0, T_pad - T), (0, 0), (0, B_pad - B)))
    # Mask keeps its caller dtype (bool/int8/f32) — no f32 upcast in the wrapper.
    mask = jnp.transpose(masks, (1, 0))                    # (T, B)
    mask = jnp.pad(mask, ((0, T_pad - T), (0, B_pad - B)))[:, None, :]
    start_col = start.astype(jnp.float32).reshape(K, 1)
    end_col = end.astype(jnp.float32).reshape(K, 1)
    trans3 = trans.astype(jnp.float32).reshape(K, K, 1)
    return emis, mask, start_col, end_col, trans3, B_pad, T_pad, TT, TB


def _crf_grid_spec(K, TT, TB, nb, nt, out_specs, scratch_shapes):
    in_specs = [
        pl.BlockSpec((TT, K, TB), lambda b, t: (t, 0, b)),    # emissions
        pl.BlockSpec((TT, 1, TB), lambda b, t: (t, 0, b)),    # mask
        pl.BlockSpec((K, 1), lambda b, t: (0, 0)),            # start
        pl.BlockSpec((K, 1), lambda b, t: (0, 0)),            # end
        pl.BlockSpec((K, K, 1), lambda b, t: (0, 0, 0)),      # transitions
    ]
    return pltpu.PrefetchScalarGridSpec(
        num_scalar_prefetch=0, grid=(nb, nt),
        in_specs=in_specs, out_specs=out_specs,
        scratch_shapes=scratch_shapes)


# batch axis is "parallel" (v7x uses both TCs only when B_pad >= 2*_BATCH_BLOCK);
# time axis carries the recursion -> "arbitrary".
_COMPILER_PARAMS = pltpu.CompilerParams(
    dimension_semantics=("parallel", "arbitrary"),
    allow_input_fusion=[True, True, True, True, True])


@jax.jit
def crf_forward_alg(emissions, masks, start, end, trans):
    """Log-partition per batch element.  emissions (B, T, K), masks (B, T)."""
    B, T, K = emissions.shape
    (emis, mask, start_col, end_col, trans3,
     B_pad, T_pad, TT, TB) = _prep_inputs(emissions, masks, start, end, trans)
    nb, nt = B_pad // TB, T_pad // TT
    logz = pl.pallas_call(
        _crf_forward_alg_kernel,
        out_shape=jax.ShapeDtypeStruct((1, B_pad), jnp.float32),
        grid_spec=_crf_grid_spec(
            K, TT, TB, nb, nt,
            out_specs=pl.BlockSpec((1, TB), lambda b, t: (0, b)),
            scratch_shapes=[pltpu.VMEM((K, TB), jnp.float32)]),
        compiler_params=_COMPILER_PARAMS,
    )(emis, mask, start_col, end_col, trans3)
    return logz[0, :B]                                        # (B,)


@jax.jit
def crf_viterbi_decode(emissions, masks, start, end, trans):
    """Best tag sequence, shape (B, T) int32."""
    B, T, K = emissions.shape
    (emis, mask, start_col, end_col, trans3,
     B_pad, T_pad, TT, TB) = _prep_inputs(emissions, masks, start, end, trans)
    nb, nt = B_pad // TB, T_pad // TT
    score, hist = pl.pallas_call(
        _crf_viterbi_fwd_kernel,
        out_shape=(jax.ShapeDtypeStruct((K, B_pad), jnp.float32),
                   jax.ShapeDtypeStruct((T_pad, K, B_pad), jnp.int8)),
        grid_spec=_crf_grid_spec(
            K, TT, TB, nb, nt,
            out_specs=(pl.BlockSpec((K, TB), lambda b, t: (0, b)),
                       pl.BlockSpec((TT, K, TB), lambda b, t: (t, 0, b))),
            scratch_shapes=[pltpu.VMEM((K, TB), jnp.float32)]),
        compiler_params=_COMPILER_PARAMS,
    )(emis, mask, start_col, end_col, trans3)

    score = score[:, :B]                                      # (K, B)
    best_last = jnp.argmax(score, axis=0).astype(jnp.int32)   # (B,)
    if T == 1:
        return best_last[:, None]

    # TODO(synk): sequential data-dependent backtracking gathers stay in plain
    # JAX (lax.scan); mirrors PyTorch, which follows backpointers regardless
    # of the mask.
    hist_use = hist[1:T, :, :B]                               # (T-1, K, B) int8

    def backtrack(carry, hist_t):
        prev = jnp.take_along_axis(hist_t, carry[None, :], axis=0)[0]
        prev = prev.astype(jnp.int32)
        return prev, prev

    _, prevs = lax.scan(backtrack, best_last, hist_use, reverse=True)
    best_tags = jnp.concatenate([prevs.T, best_last[:, None]], axis=1)
    return best_tags.astype(jnp.int32)                        # (B, T)


@jax.jit
def crf_score_sentence(emissions, tags, masks, start, end, trans):
    """Gold-path score — vectorized plain-JAX glue (no per-step Python loop)."""
    B, T, K = emissions.shape
    emissions = emissions.astype(jnp.float32)
    masks = masks.astype(jnp.float32)
    tags = tags.astype(jnp.int32)
    start = start.astype(jnp.float32)
    end = end.astype(jnp.float32)
    trans = trans.astype(jnp.float32)

    onehot = jax.nn.one_hot(tags, K, dtype=jnp.float32)           # (B, T, K)
    emit_scores = jnp.sum(emissions * onehot, axis=-1)            # (B, T)
    trans_scores = jnp.take(trans.reshape(-1),
                            tags[:, :-1] * K + tags[:, 1:])       # (B, T-1)

    score = start[tags[:, 0]]
    score = score + jnp.sum(emit_scores[:, :-1] * masks[:, :-1], axis=1)
    score = score + jnp.sum(trans_scores * masks[:, 1:], axis=1)

    last_ix = jnp.maximum(jnp.sum(masks, axis=1) - 1.0, 0.0).astype(jnp.int32)
    emis_last = emissions[jnp.arange(B), last_ix]                 # (B, K)
    last_tag_oh = jax.nn.one_hot(tags[:, -1], K, dtype=jnp.float32)
    score = score + jnp.sum(emis_last * last_tag_oh, axis=-1) * masks[:, -1]
    score = score + end[tags[:, -1]] * masks[:, -1]
    return score


class CRF:
    """JAX/Pallas port of the PyTorch CRF module (forward pass)."""

    def __init__(self, num_tags, key):
        self.num_tags = num_tags
        k1, k2, k3 = jax.random.split(key, 3)
        self.transitions = jax.random.normal(k1, (num_tags, num_tags),
                                             dtype=jnp.float32)
        self.start_transitions = jax.random.normal(k2, (num_tags,),
                                                   dtype=jnp.float32)
        self.end_transitions = jax.random.normal(k3, (num_tags,),
                                                 dtype=jnp.float32)

    def __call__(self, emissions, masks, tags=None):
        if tags is not None:
            return self._calculate_loss(emissions, masks, tags)
        return self._decode(emissions, masks)

    def _calculate_loss(self, emissions, masks, tags):
        logz = crf_forward_alg(emissions, masks, self.start_transitions,
                               self.end_transitions, self.transitions)
        gold = crf_score_sentence(emissions, tags, masks,
                                  self.start_transitions,
                                  self.end_transitions, self.transitions)
        return jnp.mean(logz - gold)

    def _decode(self, emissions, masks):
        return crf_viterbi_decode(emissions, masks, self.start_transitions,
                                  self.end_transitions, self.transitions)


# ----------------------------------------------------------------------------
# Pure-JAX references (mirror the PyTorch module exactly) for sanity checks
# ----------------------------------------------------------------------------
def _ref_forward_alg(emissions, masks, start, end, trans):
    B, T, K = emissions.shape
    alpha = jnp.broadcast_to(start[None, :], (B, K))
    for i in range(T):
        nxt = jax.scipy.special.logsumexp(
            emissions[:, i][:, :, None] + trans[None, :, :] + alpha[:, :, None],
            axis=1)
        alpha = jnp.where(masks[:, i][:, None] > 0, nxt, alpha)
    return jax.scipy.special.logsumexp(alpha + end[None, :], axis=1)


def _ref_score_sentence(emissions, tags, masks, start, end, trans):
    B, T, K = emissions.shape
    bar = jnp.arange(B)
    score = start[tags[:, 0]]
    for i in range(T - 1):
        score = score + emissions[bar, i, tags[:, i]] * masks[:, i]
        score = score + trans[tags[:, i], tags[:, i + 1]] * masks[:, i + 1]
    last_ix = jnp.maximum(jnp.sum(masks, axis=1) - 1.0, 0.0).astype(jnp.int32)
    score = score + emissions[bar, last_ix, tags[:, -1]] * masks[:, -1]
    score = score + end[tags[:, -1]] * masks[:, -1]
    return score


def _ref_viterbi_decode(emissions, masks, start, end, trans):
    B, T, K = emissions.shape
    score = start[None, :] + emissions[:, 0]
    history = []
    for i in range(1, T):
        nxt = score[:, :, None] + trans[None, :, :] + emissions[:, i][:, None, :]
        best = jnp.max(nxt, axis=1)
        idx = jnp.argmax(nxt, axis=1).astype(jnp.int32)
        score = jnp.where(masks[:, i][:, None] > 0, best, score)
        history.append(idx)
    score = score + end[None, :]
    cur = jnp.argmax(score, axis=1).astype(jnp.int32)
    tags_rev = [cur]
    for i in range(len(history) - 1, -1, -1):
        cur = jnp.take_along_axis(history[i], cur[:, None], axis=1)[:, 0]
        tags_rev.append(cur)
    tags_rev.reverse()
    return jnp.stack(tags_rev, axis=1).astype(jnp.int32)


# ----------------------------------------------------------------------------
if __name__ == "__main__":
    key = jax.random.PRNGKey(0)
    k_param, k_emis, k_tags = jax.random.split(key, 3)

    B, T, K = 2, 8, 8                                         # batch, seq, tags
    crf = CRF(num_tags=K, key=k_param)

    emissions = jax.random.normal(k_emis, (B, T, K), dtype=jnp.float32)
    # masks: first sequence full length, second has length 5
    masks = jnp.stack([
        jnp.ones((T,), jnp.float32),
        jnp.concatenate([jnp.ones((5,), jnp.float32),
                         jnp.zeros((T - 5,), jnp.float32)]),
    ], axis=0)                                                # (B, T)
    tags = jax.random.randint(k_tags, (B, T), 0, K, dtype=jnp.int32)

    # Branch 1: loss (tags given)
    loss = jax.block_until_ready(crf(emissions, masks, tags))
    # Branch 2: Viterbi decode (no tags)
    best_tags = jax.block_until_ready(crf(emissions, masks))

    # Sanity checks vs. pure-JAX references of the PyTorch module.
    logz_k = crf_forward_alg(emissions, masks, crf.start_transitions,
                             crf.end_transitions, crf.transitions)
    logz_r = _ref_forward_alg(emissions, masks, crf.start_transitions,
                              crf.end_transitions, crf.transitions)
    assert jnp.allclose(logz_k, logz_r, atol=1e-4, rtol=1e-4)

    gold_k = crf_score_sentence(emissions, tags, masks, crf.start_transitions,
                                crf.end_transitions, crf.transitions)
    gold_r = _ref_score_sentence(emissions, tags, masks, crf.start_transitions,
                                 crf.end_transitions, crf.transitions)
    assert jnp.allclose(gold_k, gold_r, atol=1e-4, rtol=1e-4)

    tags_r = _ref_viterbi_decode(emissions, masks, crf.start_transitions,
                                 crf.end_transitions, crf.transitions)
    assert jnp.array_equal(best_tags, tags_r)

    assert loss.shape == ()
    assert best_tags.shape == (B, T)
    print("KERNEL_OK")
</pallas_src>

<mosaic_0001>
module attributes {stable_mosaic.version = 11 : i64} {
  func.func @_crf_forward_alg_kernel(%arg0: i32, %arg1: i32, %arg2: memref<8x8x128xf32, #tpu.memory_space<vmem>>, %arg3: memref<8x1x128xf32, #tpu.memory_space<vmem>>, %arg4: memref<8x1xf32, #tpu.memory_space<vmem>>, %arg5: memref<8x1xf32, #tpu.memory_space<vmem>>, %arg6: memref<8x8x1xf32, #tpu.memory_space<vmem>>, %arg7: memref<1x128xf32, #tpu.memory_space<vmem>>, %arg8: memref<8x128xf32, #tpu.memory_space<vmem>>) attributes {dimension_semantics = [#tpu.dimension_semantics<parallel>, #tpu.dimension_semantics<arbitrary>], iteration_bounds = array<i64: 1, 1>, scalar_prefetch = 0 : i64, scratch_operands = 1 : i64, tpu.core_type = #tpu.core_type<tc>, window_params = [{transform_indices = @transform_0, window_bounds = array<i64: 8, 8, 128>}, {transform_indices = @transform_1, window_bounds = array<i64: 8, 1, 128>}, {pipeline_mode = #tpu.pipeline_mode<synchronous>, transform_indices = @transform_2, window_bounds = array<i64: 8, 1>}, {pipeline_mode = #tpu.pipeline_mode<synchronous>, transform_indices = @transform_3, window_bounds = array<i64: 8, 1>}, {pipeline_mode = #tpu.pipeline_mode<synchronous>, transform_indices = @transform_4, window_bounds = array<i64: 8, 8, 1>}, {transform_indices = @transform_5, window_bounds = array<i64: 1, 128>}]} {
    %c0_i32 = arith.constant 0 : i32
    %0 = arith.cmpi eq, %arg1, %c0_i32 : i32
    %1 = arith.extui %0 : i1 to i32
    %c0_i32_0 = arith.constant 0 : i32
    %2 = arith.cmpi ne, %1, %c0_i32_0 : i32
    scf.if %2 {
      %c0_57 = arith.constant 0 : index
      %c0_58 = arith.constant 0 : index
      %498 = vector.load %arg4[%c0_57, %c0_58] : memref<8x1xf32, #tpu.memory_space<vmem>>, vector<8x1xf32>
      %499 = vector.shape_cast %498 : vector<8x1xf32> to vector<8x1xf32>
      %500 = vector.broadcast %499 : vector<8x1xf32> to vector<8x128xf32>
      %c0_59 = arith.constant 0 : index
      %c0_60 = arith.constant 0 : index
      %501 = vector.load %arg8[%c0_59, %c0_60] : memref<8x128xf32, #tpu.memory_space<vmem>>, vector<8x128xf32>
      tpu.vector_store %arg8[%c0_59, %c0_60], %500 {strides = array<i32>} : memref<8x128xf32, #tpu.memory_space<vmem>>, vector<8x128xf32>,
    } else {
    }
    %c0 = arith.constant 0 : index
    %c0_1 = arith.constant 0 : index
    %c0_2 = arith.constant 0 : index
    %3 = vector.load %arg6[%c0, %c0_1, %c0_2] : memref<8x8x1xf32, #tpu.memory_space<vmem>>, vector<8x8x1xf32>
    %4 = vector.extract_strided_slice %3 {offsets = [0, 0, 0], sizes = [1, 8, 1], strides = [1, 1, 1]} : vector<8x8x1xf32> to vector<1x8x1xf32>
    %5 = vector.shape_cast %4 : vector<1x8x1xf32> to vector<8x1xf32>
    %6 = vector.extract_strided_slice %3 {offsets = [1, 0, 0], sizes = [1, 8, 1], strides = [1, 1, 1]} : vector<8x8x1xf32> to vector<1x8x1xf32>
    %7 = vector.shape_cast %6 : vector<1x8x1xf32> to vector<8x1xf32>
    %8 = arith.maximumf %5, %7 : vector<8x1xf32>
    %9 = vector.extract_strided_slice %3 {offsets = [2, 0, 0], sizes = [1, 8, 1], strides = [1, 1, 1]} : vector<8x8x1xf32> to vector<1x8x1xf32>
    %10 = vector.shape_cast %9 : vector<1x8x1xf32> to vector<8x1xf32>
    %11 = arith.maximumf %8, %10 : vector<8x1xf32>
    %12 = vector.extract_strided_slice %3 {offsets = [3, 0, 0], sizes = [1, 8, 1], strides = [1, 1, 1]} : vector<8x8x1xf32> to vector<1x8x1xf32>
    %13 = vector.shape_cast %12 : vector<1x8x1xf32> to vector<8x1xf32>
    %14 = arith.maximumf %11, %13 : vector<8x1xf32>
    %15 = vector.extract_strided_slice %3 {offsets = [4, 0, 0], sizes = [1, 8, 1], strides = [1, 1, 1]} : vector<8x8x1xf32> to vector<1x8x1xf32>
    %16 = vector.shape_cast %15 : vector<1x8x1xf32> to vector<8x1xf32>
    %17 = arith.maximumf %14, %16 : vector<8x1xf32>
    %18 = vector.extract_strided_slice %3 {offsets = [5, 0, 0], sizes = [1, 8, 1], strides = [1, 1, 1]} : vector<8x8x1xf32> to vector<1x8x1xf32>
    %19 = vector.shape_cast %18 : vector<1x8x1xf32> to vector<8x1xf32>
    %20 = arith.maximumf %17, %19 : vector<8x1xf32>
    %21 = vector.extract_strided_slice %3 {offsets = [6, 0, 0], sizes = [1, 8, 1], strides = [1, 1, 1]} : vector<8x8x1xf32> to vector<1x8x1xf32>
    %22 = vector.shape_cast %21 : vector<1x8x1xf32> to vector<8x1xf32>
    %23 = arith.maximumf %20, %22 : vector<8x1xf32>
    %24 = vector.extract_strided_slice %3 {offsets = [7, 0, 0], sizes = [1, 8, 1], strides = [1, 1, 1]} : vector<8x8x1xf32> to vector<1x8x1xf32>
    %25 = vector.shape_cast %24 : vector<1x8x1xf32> to vector<8x1xf32>
    %26 = arith.maximumf %23, %25 : vector<8x1xf32>
    %27 = vector.shape_cast %26 : vector<8x1xf32> to vector<8x1xf32>
    %28 = vector.broadcast %27 : vector<8x1xf32> to vector<8x128xf32>
    %29 = vector.extract_strided_slice %3 {offsets = [0, 0, 0], sizes = [1, 8, 1], strides = [1, 1, 1]} : vector<8x8x1xf32> to vector<1x8x1xf32>
    %30 = vector.shape_cast %29 : vector<1x8x1xf32> to vector<8x1xf32>
    %31 = arith.subf %30, %26 : vector<8x1xf32>
    %32 = math.exp %31 : vector<8x1xf32>
    %33 = vector.shape_cast %32 : vector<8x1xf32> to vector<8x1xf32>
    %34 = vector.broadcast %33 : vector<8x1xf32> to vector<8x128xf32>
    %35 = vector.extract_strided_slice %3 {offsets = [1, 0, 0], sizes = [1, 8, 1], strides = [1, 1, 1]} : vector<8x8x1xf32> to vector<1x8x1xf32>
    %36 = vector.shape_cast %35 : vector<1x8x1xf32> to vector<8x1xf32>
    %37 = arith.subf %36, %26 : vector<8x1xf32>
    %38 = math.exp %37 : vector<8x1xf32>
    %39 = vector.shape_cast %38 : vector<8x1xf32> to vector<8x1xf32>
    %40 = vector.broadcast %39 : vector<8x1xf32> to vector<8x128xf32>
    %41 = vector.extract_strided_slice %3 {offsets = [2, 0, 0], sizes = [1, 8, 1], strides = [1, 1, 1]} : vector<8x8x1xf32> to vector<1x8x1xf32>
    %42 = vector.shape_cast %41 : vector<1x8x1xf32> to vector<8x1xf32>
    %43 = arith.subf %42, %26 : vector<8x1xf32>
    %44 = math.exp %43 : vector<8x1xf32>
    %45 = vector.shape_cast %44 : vector<8x1xf32> to vector<8x1xf32>
    %46 = vector.broadcast %45 : vector<8x1xf32> to vector<8x128xf32>
    %47 = vector.extract_strided_slice %3 {offsets = [3, 0, 0], sizes = [1, 8, 1], strides = [1, 1, 1]} : vector<8x8x1xf32> to vector<1x8x1xf32>
    %48 = vector.shape_cast %47 : vector<1x8x1xf32> to vector<8x1xf32>
    %49 = arith.subf %48, %26 : vector<8x1xf32>
    %50 = math.exp %49 : vector<8x1xf32>
    %51 = vector.shape_cast %50 : vector<8x1xf32> to vector<8x1xf32>
    %52 = vector.broadcast %51 : vector<8x1xf32> to vector<8x128xf32>
    %53 = vector.extract_strided_slice %3 {offsets = [4, 0, 0], sizes = [1, 8, 1], strides = [1, 1, 1]} : vector<8x8x1xf32> to vector<1x8x1xf32>
    %54 = vector.shape_cast %53 : vector<1x8x1xf32> to vector<8x1xf32>
    %55 = arith.subf %54, %26 : vector<8x1xf32>
    %56 = math.exp %55 : vector<8x1xf32>
    %57 = vector.shape_cast %56 : vector<8x1xf32> to vector<8x1xf32>
    %58 = vector.broadcast %57 : vector<8x1xf32> to vector<8x128xf32>
    %59 = vector.extract_strided_slice %3 {offsets = [5, 0, 0], sizes = [1, 8, 1], strides = [1, 1, 1]} : vector<8x8x1xf32> to vector<1x8x1xf32>
    %60 = vector.shape_cast %59 : vector<1x8x1xf32> to vector<8x1xf32>
    %61 = arith.subf %60, %26 : vector<8x1xf32>
    %62 = math.exp %61 : vector<8x1xf32>
    %63 = vector.shape_cast %62 : vector<8x1xf32> to vector<8x1xf32>
    %64 = vector.broadcast %63 : vector<8x1xf32> to vector<8x128xf32>
    %65 = vector.extract_strided_slice %3 {offsets = [6, 0, 0], sizes = [1, 8, 1], strides = [1, 1, 1]} : vector<8x8x1xf32> to vector<1x8x1xf32>
    %66 = vector.shape_cast %65 : vector<1x8x1xf32> to vector<8x1xf32>
    %67 = arith.subf %66, %26 : vector<8x1xf32>
    %68 = math.exp %67 : vector<8x1xf32>
    %69 = vector.shape_cast %68 : vector<8x1xf32> to vector<8x1xf32>
    %70 = vector.broadcast %69 : vector<8x1xf32> to vector<8x128xf32>
    %71 = vector.extract_strided_slice %3 {offsets = [7, 0, 0], sizes = [1, 8, 1], strides = [1, 1, 1]} : vector<8x8x1xf32> to vector<1x8x1xf32>
    %72 = vector.shape_cast %71 : vector<1x8x1xf32> to vector<8x1xf32>
    %73 = arith.subf %72, %26 : vector<8x1xf32>
    %74 = math.exp %73 : vector<8x1xf32>
    %75 = vector.shape_cast %74 : vector<8x1xf32> to vector<8x1xf32>
    %76 = vector.broadcast %75 : vector<8x1xf32> to vector<8x128xf32>
    %c0_3 = arith.constant 0 : index
    %c0_4 = arith.constant 0 : index
    %77 = vector.load %arg8[%c0_3, %c0_4] : memref<8x128xf32, #tpu.memory_space<vmem>>, vector<8x128xf32>
    %c0_i32_5 = arith.constant 0 : i32
    %78 = arith.index_cast %c0_i32_5 : i32 to index
    %c0_6 = arith.constant 0 : index
    %c0_7 = arith.constant 0 : index
    %79 = vector.load %arg2[%78, %c0_6, %c0_7] : memref<8x8x128xf32, #tpu.memory_space<vmem>>, vector<1x8x128xf32>
    %80 = vector.shape_cast %79 : vector<1x8x128xf32> to vector<8x128xf32>
    %81 = arith.addf %77, %80 : vector<8x128xf32>
    %cst = arith.constant dense<0xFF800000> : vector<128xf32>
    %82 = vector.multi_reduction <maximumf>, %81, %cst [0] : vector<8x128xf32> to vector<128xf32>
    %83 = vector.shape_cast %82 : vector<128xf32> to vector<1x128xf32>
    %84 = vector.broadcast %83 : vector<1x128xf32> to vector<8x128xf32>
    %85 = arith.subf %81, %84 : vector<8x128xf32>
    %86 = math.exp %85 : vector<8x128xf32>
    %87 = vector.extract_strided_slice %86 {offsets = [0, 0], sizes = [1, 128], strides = [1, 1]} : vector<8x128xf32> to vector<1x128xf32>
    %88 = vector.broadcast %87 : vector<1x128xf32> to vector<8x128xf32>
    %89 = arith.mulf %88, %34 : vector<8x128xf32>
    %90 = vector.extract_strided_slice %86 {offsets = [1, 0], sizes = [1, 128], strides = [1, 1]} : vector<8x128xf32> to vector<1x128xf32>
    %91 = vector.broadcast %90 : vector<1x128xf32> to vector<8x128xf32>
    %92 = arith.mulf %91, %40 : vector<8x128xf32>
    %93 = arith.addf %89, %92 : vector<8x128xf32>
    %94 = vector.extract_strided_slice %86 {offsets = [2, 0], sizes = [1, 128], strides = [1, 1]} : vector<8x128xf32> to vector<1x128xf32>
    %95 = vector.broadcast %94 : vector<1x128xf32> to vector<8x128xf32>
    %96 = arith.mulf %95, %46 : vector<8x128xf32>
    %97 = arith.addf %93, %96 : vector<8x128xf32>
    %98 = vector.extract_strided_slice %86 {offsets = [3, 0], sizes = [1, 128], strides = [1, 1]} : vector<8x128xf32> to vector<1x128xf32>
    %99 = vector.broadcast %98 : vector<1x128xf32> to vector<8x128xf32>
    %100 = arith.mulf %99, %52 : vector<8x128xf32>
    %101 = arith.addf %97, %100 : vector<8x128xf32>
    %102 = vector.extract_strided_slice %86 {offsets = [4, 0], sizes = [1, 128], strides = [1, 1]} : vector<8x128xf32> to vector<1x128xf32>
    %103 = vector.broadcast %102 : vector<1x128xf32> to vector<8x128xf32>
    %104 = arith.mulf %103, %58 : vector<8x128xf32>
    %105 = arith.addf %101, %104 : vector<8x128xf32>
    %106 = vector.extract_strided_slice %86 {offsets = [5, 0], sizes = [1, 128], strides = [1, 1]} : vector<8x128xf32> to vector<1x128xf32>
    %107 = vector.broadcast %106 : vector<1x128xf32> to vector<8x128xf32>
    %108 = arith.mulf %107, %64 : vector<8x128xf32>
    %109 = arith.addf %105, %108 : vector<8x128xf32>
    %110 = vector.extract_strided_slice %86 {offsets = [6, 0], sizes = [1, 128], strides = [1, 1]} : vector<8x128xf32> to vector<1x128xf32>
    %111 = vector.broadcast %110 : vector<1x128xf32> to vector<8x128xf32>
    %112 = arith.mulf %111, %70 : vector<8x128xf32>
    %113 = arith.addf %109, %112 : vector<8x128xf32>
    %114 = vector.extract_strided_slice %86 {offsets = [7, 0], sizes = [1, 128], strides = [1, 1]} : vector<8x128xf32> to vector<1x128xf32>
    %115 = vector.broadcast %114 : vector<1x128xf32> to vector<8x128xf32>
    %116 = arith.mulf %115, %76 : vector<8x128xf32>
    %117 = arith.addf %113, %116 : vector<8x128xf32>
    %118 = vector.broadcast %83 : vector<1x128xf32> to vector<8x128xf32>
    %119 = arith.addf %118, %28 : vector<8x128xf32>
    %120 = math.log %117 : vector<8x128xf32>
    %121 = arith.addf %119, %120 : vector<8x128xf32>
    %122 = arith.index_cast %c0_i32_5 : i32 to index
    %c0_8 = arith.constant 0 : index
    %c0_9 = arith.constant 0 : index
    %123 = vector.load %arg3[%122, %c0_8, %c0_9] : memref<8x1x128xf32, #tpu.memory_space<vmem>>, vector<1x1x128xf32>
    %124 = vector.shape_cast %123 : vector<1x1x128xf32> to vector<1x128xf32>
    %cst_10 = arith.constant 0.000000e+00 : f32
    %125 = vector.broadcast %cst_10 : f32 to vector<1x128xf32>
    %126 = arith.cmpf one, %124, %125 : vector<1x128xf32>
    %127 = vector.shape_cast %126 : vector<1x128xi1> to vector<1x128xi1>
    %128 = vector.broadcast %127 : vector<1x128xi1> to vector<8x128xi1>
    %129 = arith.select %128, %121, %77 : vector<8x128xi1>, vector<8x128xf32>
    %c1_i32 = arith.constant 1 : i32
    %130 = arith.index_cast %c1_i32 : i32 to index
    %c0_11 = arith.constant 0 : index
    %c0_12 = arith.constant 0 : index
    %131 = vector.load %arg2[%130, %c0_11, %c0_12] : memref<8x8x128xf32, #tpu.memory_space<vmem>>, vector<1x8x128xf32>
    %132 = vector.shape_cast %131 : vector<1x8x128xf32> to vector<8x128xf32>
    %133 = arith.addf %129, %132 : vector<8x128xf32>
    %cst_13 = arith.constant dense<0xFF800000> : vector<128xf32>
    %134 = vector.multi_reduction <maximumf>, %133, %cst_13 [0] : vector<8x128xf32> to vector<128xf32>
    %135 = vector.shape_cast %134 : vector<128xf32> to vector<1x128xf32>
    %136 = vector.broadcast %135 : vector<1x128xf32> to vector<8x128xf32>
    %137 = arith.subf %133, %136 : vector<8x128xf32>
    %138 = math.exp %137 : vector<8x128xf32>
    %139 = vector.extract_strided_slice %138 {offsets = [0, 0], sizes = [1, 128], strides = [1, 1]} : vector<8x128xf32> to vector<1x128xf32>
    %140 = vector.broadcast %139 : vector<1x128xf32> to vector<8x128xf32>
    %141 = arith.mulf %140, %34 : vector<8x128xf32>
    %142 = vector.extract_strided_slice %138 {offsets = [1, 0], sizes = [1, 128], strides = [1, 1]} : vector<8x128xf32> to vector<1x128xf32>
    %143 = vector.broadcast %142 : vector<1x128xf32> to vector<8x128xf32>
    %144 = arith.mulf %143, %40 : vector<8x128xf32>
    %145 = arith.addf %141, %144 : vector<8x128xf32>
    %146 = vector.extract_strided_slice %138 {offsets = [2, 0], sizes = [1, 128], strides = [1, 1]} : vector<8x128xf32> to vector<1x128xf32>
    %147 = vector.broadcast %146 : vector<1x128xf32> to vector<8x128xf32>
    %148 = arith.mulf %147, %46 : vector<8x128xf32>
    %149 = arith.addf %145, %148 : vector<8x128xf32>
    %150 = vector.extract_strided_slice %138 {offsets = [3, 0], sizes = [1, 128], strides = [1, 1]} : vector<8x128xf32> to vector<1x128xf32>
    %151 = vector.broadcast %150 : vector<1x128xf32> to vector<8x128xf32>
    %152 = arith.mulf %151, %52 : vector<8x128xf32>
    %153 = arith.addf %149, %152 : vector<8x128xf32>
    %154 = vector.extract_strided_slice %138 {offsets = [4, 0], sizes = [1, 128], strides = [1, 1]} : vector<8x128xf32> to vector<1x128xf32>
    %155 = vector.broadcast %154 : vector<1x128xf32> to vector<8x128xf32>
    %156 = arith.mulf %155, %58 : vector<8x128xf32>
    %157 = arith.addf %153, %156 : vector<8x128xf32>
    %158 = vector.extract_strided_slice %138 {offsets = [5, 0], sizes = [1, 128], strides = [1, 1]} : vector<8x128xf32> to vector<1x128xf32>
    %159 = vector.broadcast %158 : vector<1x128xf32> to vector<8x128xf32>
    %160 = arith.mulf %159, %64 : vector<8x128xf32>
    %161 = arith.addf %157, %160 : vector<8x128xf32>
    %162 = vector.extract_strided_slice %138 {offsets = [6, 0], sizes = [1, 128], strides = [1, 1]} : vector<8x128xf32> to vector<1x128xf32>
    %163 = vector.broadcast %162 : vector<1x128xf32> to vector<8x128xf32>
    %164 = arith.mulf %163, %70 : vector<8x128xf32>
    %165 = arith.addf %161, %164 : vector<8x128xf32>
    %166 = vector.extract_strided_slice %138 {offsets = [7, 0], sizes = [1, 128], strides = [1, 1]} : vector<8x128xf32> to vector<1x128xf32>
    %167 = vector.broadcast %166 : vector<1x128xf32> to vector<8x128xf32>
    %168 = arith.mulf %167, %76 : vector<8x128xf32>
    %169 = arith.addf %165, %168 : vector<8x128xf32>
    %170 = vector.broadcast %135 : vector<1x128xf32> to vector<8x128xf32>
    %171 = arith.addf %170, %28 : vector<8x128xf32>
    %172 = math.log %169 : vector<8x128xf32>
    %173 = arith.addf %171, %172 : vector<8x128xf32>
    %174 = arith.index_cast %c1_i32 : i32 to index
    %c0_14 = arith.constant 0 : index
    %c0_15 = arith.constant 0 : index
    %175 = vector.load %arg3[%174, %c0_14, %c0_15] : memref<8x1x128xf32, #tpu.memory_space<vmem>>, vector<1x1x128xf32>
    %176 = vector.shape_cast %175 : vector<1x1x128xf32> to vector<1x128xf32>
    %cst_16 = arith.constant 0.000000e+00 : f32
    %177 = vector.broadcast %cst_16 : f32 to vector<1x128xf32>
    %178 = arith.cmpf one, %176, %177 : vector<1x128xf32>
    %179 = vector.shape_cast %178 : vector<1x128xi1> to vector<1x128xi1>
    %180 = vector.broadcast %179 : vector<1x128xi1> to vector<8x128xi1>
    %181 = arith.select %180, %173, %129 : vector<8x128xi1>, vector<8x128xf32>
    %c2_i32 = arith.constant 2 : i32
    %182 = arith.index_cast %c2_i32 : i32 to index
    %c0_17 = arith.constant 0 : index
    %c0_18 = arith.constant 0 : index
    %183 = vector.load %arg2[%182, %c0_17, %c0_18] : memref<8x8x128xf32, #tpu.memory_space<vmem>>, vector<1x8x128xf32>
    %184 = vector.shape_cast %183 : vector<1x8x128xf32> to vector<8x128xf32>
    %185 = arith.addf %181, %184 : vector<8x128xf32>
    %cst_19 = arith.constant dense<0xFF800000> : vector<128xf32>
    %186 = vector.multi_reduction <maximumf>, %185, %cst_19 [0] : vector<8x128xf32> to vector<128xf32>
    %187 = vector.shape_cast %186 : vector<128xf32> to vector<1x128xf32>
    %188 = vector.broadcast %187 : vector<1x128xf32> to vector<8x128xf32>
    %189 = arith.subf %185, %188 : vector<8x128xf32>
    %190 = math.exp %189 : vector<8x128xf32>
    %191 = vector.extract_strided_slice %190 {offsets = [0, 0], sizes = [1, 128], strides = [1, 1]} : vector<8x128xf32> to vector<1x128xf32>
    %192 = vector.broadcast %191 : vector<1x128xf32> to vector<8x128xf32>
    %193 = arith.mulf %192, %34 : vector<8x128xf32>
    %194 = vector.extract_strided_slice %190 {offsets = [1, 0], sizes = [1, 128], strides = [1, 1]} : vector<8x128xf32> to vector<1x128xf32>
    %195 = vector.broadcast %194 : vector<1x128xf32> to vector<8x128xf32>
    %196 = arith.mulf %195, %40 : vector<8x128xf32>
    %197 = arith.addf %193, %196 : vector<8x128xf32>
    %198 = vector.extract_strided_slice %190 {offsets = [2, 0], sizes = [1, 128], strides = [1, 1]} : vector<8x128xf32> to vector<1x128xf32>
    %199 = vector.broadcast %198 : vector<1x128xf32> to vector<8x128xf32>
    %200 = arith.mulf %199, %46 : vector<8x128xf32>
    %201 = arith.addf %197, %200 : vector<8x128xf32>
    %202 = vector.extract_strided_slice %190 {offsets = [3, 0], sizes = [1, 128], strides = [1, 1]} : vector<8x128xf32> to vector<1x128xf32>
    %203 = vector.broadcast %202 : vector<1x128xf32> to vector<8x128xf32>
    %204 = arith.mulf %203, %52 : vector<8x128xf32>
    %205 = arith.addf %201, %204 : vector<8x128xf32>
    %206 = vector.extract_strided_slice %190 {offsets = [4, 0], sizes = [1, 128], strides = [1, 1]} : vector<8x128xf32> to vector<1x128xf32>
    %207 = vector.broadcast %206 : vector<1x128xf32> to vector<8x128xf32>
    %208 = arith.mulf %207, %58 : vector<8x128xf32>
    %209 = arith.addf %205, %208 : vector<8x128xf32>
    %210 = vector.extract_strided_slice %190 {offsets = [5, 0], sizes = [1, 128], strides = [1, 1]} : vector<8x128xf32> to vector<1x128xf32>
    %211 = vector.broadcast %210 : vector<1x128xf32> to vector<8x128xf32>
    %212 = arith.mulf %211, %64 : vector<8x128xf32>
    %213 = arith.addf %209, %212 : vector<8x128xf32>
    %214 = vector.extract_strided_slice %190 {offsets = [6, 0], sizes = [1, 128], strides = [1, 1]} : vector<8x128xf32> to vector<1x128xf32>
    %215 = vector.broadcast %214 : vector<1x128xf32> to vector<8x128xf32>
    %216 = arith.mulf %215, %70 : vector<8x128xf32>
    %217 = arith.addf %213, %216 : vector<8x128xf32>
    %218 = vector.extract_strided_slice %190 {offsets = [7, 0], sizes = [1, 128], strides = [1, 1]} : vector<8x128xf32> to vector<1x128xf32>
    %219 = vector.broadcast %218 : vector<1x128xf32> to vector<8x128xf32>
    %220 = arith.mulf %219, %76 : vector<8x128xf32>
    %221 = arith.addf %217, %220 : vector<8x128xf32>
    %222 = vector.broadcast %187 : vector<1x128xf32> to vector<8x128xf32>
    %223 = arith.addf %222, %28 : vector<8x128xf32>
    %224 = math.log %221 : vector<8x128xf32>
    %225 = arith.addf %223, %224 : vector<8x128xf32>
    %226 = arith.index_cast %c2_i32 : i32 to index
    %c0_20 = arith.constant 0 : index
    %c0_21 = arith.constant 0 : index
    %227 = vector.load %arg3[%226, %c0_20, %c0_21] : memref<8x1x128xf32, #tpu.memory_space<vmem>>, vector<1x1x128xf32>
    %228 = vector.shape_cast %227 : vector<1x1x128xf32> to vector<1x128xf32>
    %cst_22 = arith.constant 0.000000e+00 : f32
    %229 = vector.broadcast %cst_22 : f32 to vector<1x128xf32>
    %230 = arith.cmpf one, %228, %229 : vector<1x128xf32>
    %231 = vector.shape_cast %230 : vector<1x128xi1> to vector<1x128xi1>
    %232 = vector.broadcast %231 : vector<1x128xi1> to vector<8x128xi1>
    %233 = arith.select %232, %225, %181 : vector<8x128xi1>, vector<8x128xf32>
    %c3_i32 = arith.constant 3 : i32
    %234 = arith.index_cast %c3_i32 : i32 to index
    %c0_23 = arith.constant 0 : index
    %c0_24 = arith.constant 0 : index
    %235 = vector.load %arg2[%234, %c0_23, %c0_24] : memref<8x8x128xf32, #tpu.memory_space<vmem>>, vector<1x8x128xf32>
    %236 = vector.shape_cast %235 : vector<1x8x128xf32> to vector<8x128xf32>
    %237 = arith.addf %233, %236 : vector<8x128xf32>
    %cst_25 = arith.constant dense<0xFF800000> : vector<128xf32>
    %238 = vector.multi_reduction <maximumf>, %237, %cst_25 [0] : vector<8x128xf32> to vector<128xf32>
    %239 = vector.shape_cast %238 : vector<128xf32> to vector<1x128xf32>
    %240 = vector.broadcast %239 : vector<1x128xf32> to vector<8x128xf32>
    %241 = arith.subf %237, %240 : vector<8x128xf32>
    %242 = math.exp %241 : vector<8x128xf32>
    %243 = vector.extract_strided_slice %242 {offsets = [0, 0], sizes = [1, 128], strides = [1, 1]} : vector<8x128xf32> to vector<1x128xf32>
    %244 = vector.broadcast %243 : vector<1x128xf32> to vector<8x128xf32>
    %245 = arith.mulf %244, %34 : vector<8x128xf32>
    %246 = vector.extract_strided_slice %242 {offsets = [1, 0], sizes = [1, 128], strides = [1, 1]} : vector<8x128xf32> to vector<1x128xf32>
    %247 = vector.broadcast %246 : vector<1x128xf32> to vector<8x128xf32>
    %248 = arith.mulf %247, %40 : vector<8x128xf32>
    %249 = arith.addf %245, %248 : vector<8x128xf32>
    %250 = vector.extract_strided_slice %242 {offsets = [2, 0], sizes = [1, 128], strides = [1, 1]} : vector<8x128xf32> to vector<1x128xf32>
    %251 = vector.broadcast %250 : vector<1x128xf32> to vector<8x128xf32>
    %252 = arith.mulf %251, %46 : vector<8x128xf32>
    %253 = arith.addf %249, %252 : vector<8x128xf32>
    %254 = vector.extract_strided_slice %242 {offsets = [3, 0], sizes = [1, 128], strides = [1, 1]} : vector<8x128xf32> to vector<1x128xf32>
    %255 = vector.broadcast %254 : vector<1x128xf32> to vector<8x128xf32>
    %256 = arith.mulf %255, %52 : vector<8x128xf32>
    %257 = arith.addf %253, %256 : vector<8x128xf32>
    %258 = vector.extract_strided_slice %242 {offsets = [4, 0], sizes = [1, 128], strides = [1, 1]} : vector<8x128xf32> to vector<1x128xf32>
    %259 = vector.broadcast %258 : vector<1x128xf32> to vector<8x128xf32>
    %260 = arith.mulf %259, %58 : vector<8x128xf32>
    %261 = arith.addf %257, %260 : vector<8x128xf32>
    %262 = vector.extract_strided_slice %242 {offsets = [5, 0], sizes = [1, 128], strides = [1, 1]} : vector<8x128xf32> to vector<1x128xf32>
    %263 = vector.broadcast %262 : vector<1x128xf32> to vector<8x128xf32>
    %264 = arith.mulf %263, %64 : vector<8x128xf32>
    %265 = arith.addf %261, %264 : vector<8x128xf32>
    %266 = vector.extract_strided_slice %242 {offsets = [6, 0], sizes = [1, 128], strides = [1, 1]} : vector<8x128xf32> to vector<1x128xf32>
    %267 = vector.broadcast %266 : vector<1x128xf32> to vector<8x128xf32>
    %268 = arith.mulf %267, %70 : vector<8x128xf32>
    %269 = arith.addf %265, %268 : vector<8x128xf32>
    %270 = vector.extract_strided_slice %242 {offsets = [7, 0], sizes = [1, 128], strides = [1, 1]} : vector<8x128xf32> to vector<1x128xf32>
    %271 = vector.broadcast %270 : vector<1x128xf32> to vector<8x128xf32>
    %272 = arith.mulf %271, %76 : vector<8x128xf32>
    %273 = arith.addf %269, %272 : vector<8x128xf32>
    %274 = vector.broadcast %239 : vector<1x128xf32> to vector<8x128xf32>
    %275 = arith.addf %274, %28 : vector<8x128xf32>
    %276 = math.log %273 : vector<8x128xf32>
    %277 = arith.addf %275, %276 : vector<8x128xf32>
    %278 = arith.index_cast %c3_i32 : i32 to index
    %c0_26 = arith.constant 0 : index
    %c0_27 = arith.constant 0 : index
    %279 = vector.load %arg3[%278, %c0_26, %c0_27] : memref<8x1x128xf32, #tpu.memory_space<vmem>>, vector<1x1x128xf32>
    %280 = vector.shape_cast %279 : vector<1x1x128xf32> to vector<1x128xf32>
    %cst_28 = arith.constant 0.000000e+00 : f32
    %281 = vector.broadcast %cst_28 : f32 to vector<1x128xf32>
    %282 = arith.cmpf one, %280, %281 : vector<1x128xf32>
    %283 = vector.shape_cast %282 : vector<1x128xi1> to vector<1x128xi1>
    %284 = vector.broadcast %283 : vector<1x128xi1> to vector<8x128xi1>
    %285 = arith.select %284, %277, %233 : vector<8x128xi1>, vector<8x128xf32>
    %c4_i32 = arith.constant 4 : i32
    %286 = arith.index_cast %c4_i32 : i32 to index
    %c0_29 = arith.constant 0 : index
    %c0_30 = arith.constant 0 : index
    %287 = vector.load %arg2[%286, %c0_29, %c0_30] : memref<8x8x128xf32, #tpu.memory_space<vmem>>, vector<1x8x128xf32>
    %288 = vector.shape_cast %287 : vector<1x8x128xf32> to vector<8x128xf32>
    %289 = arith.addf %285, %288 : vector<8x128xf32>
    %cst_31 = arith.constant dense<0xFF800000> : vector<128xf32>
    %290 = vector.multi_reduction <maximumf>, %289, %cst_31 [0] : vector<8x128xf32> to vector<128xf32>
    %291 = vector.shape_cast %290 : vector<128xf32> to vector<1x128xf32>
    %292 = vector.broadcast %291 : vector<1x128xf32> to vector<8x128xf32>
    %293 = arith.subf %289, %292 : vector<8x128xf32>
    %294 = math.exp %293 : vector<8x128xf32>
    %295 = vector.extract_strided_slice %294 {offsets = [0, 0], sizes = [1, 128], strides = [1, 1]} : vector<8x128xf32> to vector<1x128xf32>
    %296 = vector.broadcast %295 : vector<1x128xf32> to vector<8x128xf32>
    %297 = arith.mulf %296, %34 : vector<8x128xf32>
    %298 = vector.extract_strided_slice %294 {offsets = [1, 0], sizes = [1, 128], strides = [1, 1]} : vector<8x128xf32> to vector<1x128xf32>
    %299 = vector.broadcast %298 : vector<1x128xf32> to vector<8x128xf32>
    %300 = arith.mulf %299, %40 : vector<8x128xf32>
    %301 = arith.addf %297, %300 : vector<8x128xf32>
    %302 = vector.extract_strided_slice %294 {offsets = [2, 0], sizes = [1, 128], strides = [1, 1]} : vector<8x128xf32> to vector<1x128xf32>
    %303 = vector.broadcast %302 : vector<1x128xf32> to vector<8x128xf32>
    %304 = arith.mulf %303, %46 : vector<8x128xf32>
    %305 = arith.addf %301, %304 : vector<8x128xf32>
    %306 = vector.extract_strided_slice %294 {offsets = [3, 0], sizes = [1, 128], strides = [1, 1]} : vector<8x128xf32> to vector<1x128xf32>
    %307 = vector.broadcast %306 : vector<1x128xf32> to vector<8x128xf32>
    %308 = arith.mulf %307, %52 : vector<8x128xf32>
    %309 = arith.addf %305, %308 : vector<8x128xf32>
    %310 = vector.extract_strided_slice %294 {offsets = [4, 0], sizes = [1, 128], strides = [1, 1]} : vector<8x128xf32> to vector<1x128xf32>
    %311 = vector.broadcast %310 : vector<1x128xf32> to vector<8x128xf32>
    %312 = arith.mulf %311, %58 : vector<8x128xf32>
    %313 = arith.addf %309, %312 : vector<8x128xf32>
    %314 = vector.extract_strided_slice %294 {offsets = [5, 0], sizes = [1, 128], strides = [1, 1]} : vector<8x128xf32> to vector<1x128xf32>
    %315 = vector.broadcast %314 : vector<1x128xf32> to vector<8x128xf32>
    %316 = arith.mulf %315, %64 : vector<8x128xf32>
    %317 = arith.addf %313, %316 : vector<8x128xf32>
    %318 = vector.extract_strided_slice %294 {offsets = [6, 0], sizes = [1, 128], strides = [1, 1]} : vector<8x128xf32> to vector<1x128xf32>
    %319 = vector.broadcast %318 : vector<1x128xf32> to vector<8x128xf32>
    %320 = arith.mulf %319, %70 : vector<8x128xf32>
    %321 = arith.addf %317, %320 : vector<8x128xf32>
    %322 = vector.extract_strided_slice %294 {offsets = [7, 0], sizes = [1, 128], strides = [1, 1]} : vector<8x128xf32> to vector<1x128xf32>
    %323 = vector.broadcast %322 : vector<1x128xf32> to vector<8x128xf32>
    %324 = arith.mulf %323, %76 : vector<8x128xf32>
    %325 = arith.addf %321, %324 : vector<8x128xf32>
    %326 = vector.broadcast %291 : vector<1x128xf32> to vector<8x128xf32>
    %327 = arith.addf %326, %28 : vector<8x128xf32>
    %328 = math.log %325 : vector<8x128xf32>
    %329 = arith.addf %327, %328 : vector<8x128xf32>
    %330 = arith.index_cast %c4_i32 : i32 to index
    %c0_32 = arith.constant 0 : index
    %c0_33 = arith.constant 0 : index
    %331 = vector.load %arg3[%330, %c0_32, %c0_33] : memref<8x1x128xf32, #tpu.memory_space<vmem>>, vector<1x1x128xf32>
    %332 = vector.shape_cast %331 : vector<1x1x128xf32> to vector<1x128xf32>
    %cst_34 = arith.constant 0.000000e+00 : f32
    %333 = vector.broadcast %cst_34 : f32 to vector<1x128xf32>
    %334 = arith.cmpf one, %332, %333 : vector<1x128xf32>
    %335 = vector.shape_cast %334 : vector<1x128xi1> to vector<1x128xi1>
    %336 = vector.broadcast %335 : vector<1x128xi1> to vector<8x128xi1>
    %337 = arith.select %336, %329, %285 : vector<8x128xi1>, vector<8x128xf32>
    %c5_i32 = arith.constant 5 : i32
    %338 = arith.index_cast %c5_i32 : i32 to index
    %c0_35 = arith.constant 0 : index
    %c0_36 = arith.constant 0 : index
    %339 = vector.load %arg2[%338, %c0_35, %c0_36] : memref<8x8x128xf32, #tpu.memory_space<vmem>>, vector<1x8x128xf32>
    %340 = vector.shape_cast %339 : vector<1x8x128xf32> to vector<8x128xf32>
    %341 = arith.addf %337, %340 : vector<8x128xf32>
    %cst_37 = arith.constant dense<0xFF800000> : vector<128xf32>
    %342 = vector.multi_reduction <maximumf>, %341, %cst_37 [0] : vector<8x128xf32> to vector<128xf32>
    %343 = vector.shape_cast %342 : vector<128xf32> to vector<1x128xf32>
    %344 = vector.broadcast %343 : vector<1x128xf32> to vector<8x128xf32>
    %345 = arith.subf %341, %344 : vector<8x128xf32>
    %346 = math.exp %345 : vector<8x128xf32>
    %347 = vector.extract_strided_slice %346 {offsets = [0, 0], sizes = [1, 128], strides = [1, 1]} : vector<8x128xf32> to vector<1x128xf32>
    %348 = vector.broadcast %347 : vector<1x128xf32> to vector<8x128xf32>
    %349 = arith.mulf %348, %34 : vector<8x128xf32>
    %350 = vector.extract_strided_slice %346 {offsets = [1, 0], sizes = [1, 128], strides = [1, 1]} : vector<8x128xf32> to vector<1x128xf32>
    %351 = vector.broadcast %350 : vector<1x128xf32> to vector<8x128xf32>
    %352 = arith.mulf %351, %40 : vector<8x128xf32>
    %353 = arith.addf %349, %352 : vector<8x128xf32>
    %354 = vector.extract_strided_slice %346 {offsets = [2, 0], sizes = [1, 128], strides = [1, 1]} : vector<8x128xf32> to vector<1x128xf32>
    %355 = vector.broadcast %354 : vector<1x128xf32> to vector<8x128xf32>
    %356 = arith.mulf %355, %46 : vector<8x128xf32>
    %357 = arith.addf %353, %356 : vector<8x128xf32>
    %358 = vector.extract_strided_slice %346 {offsets = [3, 0], sizes = [1, 128], strides = [1, 1]} : vector<8x128xf32> to vector<1x128xf32>
    %359 = vector.broadcast %358 : vector<1x128xf32> to vector<8x128xf32>
    %360 = arith.mulf %359, %52 : vector<8x128xf32>
    %361 = arith.addf %357, %360 : vector<8x128xf32>
    %362 = vector.extract_strided_slice %346 {offsets = [4, 0], sizes = [1, 128], strides = [1, 1]} : vector<8x128xf32> to vector<1x128xf32>
    %363 = vector.broadcast %362 : vector<1x128xf32> to vector<8x128xf32>
    %364 = arith.mulf %363, %58 : vector<8x128xf32>
    %365 = arith.addf %361, %364 : vector<8x128xf32>
    %366 = vector.extract_strided_slice %346 {offsets = [5, 0], sizes = [1, 128], strides = [1, 1]} : vector<8x128xf32> to vector<1x128xf32>
    %367 = vector.broadcast %366 : vector<1x128xf32> to vector<8x128xf32>
    %368 = arith.mulf %367, %64 : vector<8x128xf32>
    %369 = arith.addf %365, %368 : vector<8x128xf32>
    %370 = vector.extract_strided_slice %346 {offsets = [6, 0], sizes = [1, 128], strides = [1, 1]} : vector<8x128xf32> to vector<1x128xf32>
    %371 = vector.broadcast %370 : vector<1x128xf32> to vector<8x128xf32>
    %372 = arith.mulf %371, %70 : vector<8x128xf32>
    %373 = arith.addf %369, %372 : vector<8x128xf32>
    %374 = vector.extract_strided_slice %346 {offsets = [7, 0], sizes = [1, 128], strides = [1, 1]} : vector<8x128xf32> to vector<1x128xf32>
    %375 = vector.broadcast %374 : vector<1x128xf32> to vector<8x128xf32>
    %376 = arith.mulf %375, %76 : vector<8x128xf32>
    %377 = arith.addf %373, %376 : vector<8x128xf32>
    %378 = vector.broadcast %343 : vector<1x128xf32> to vector<8x128xf32>
    %379 = arith.addf %378, %28 : vector<8x128xf32>
    %380 = math.log %377 : vector<8x128xf32>
    %381 = arith.addf %379, %380 : vector<8x128xf32>
    %382 = arith.index_cast %c5_i32 : i32 to index
    %c0_38 = arith.constant 0 : index
    %c0_39 = arith.constant 0 : index
    %383 = vector.load %arg3[%382, %c0_38, %c0_39] : memref<8x1x128xf32, #tpu.memory_space<vmem>>, vector<1x1x128xf32>
    %384 = vector.shape_cast %383 : vector<1x1x128xf32> to vector<1x128xf32>
    %cst_40 = arith.constant 0.000000e+00 : f32
    %385 = vector.broadcast %cst_40 : f32 to vector<1x128xf32>
    %386 = arith.cmpf one, %384, %385 : vector<1x128xf32>
    %387 = vector.shape_cast %386 : vector<1x128xi1> to vector<1x128xi1>
    %388 = vector.broadcast %387 : vector<1x128xi1> to vector<8x128xi1>
    %389 = arith.select %388, %381, %337 : vector<8x128xi1>, vector<8x128xf32>
    %c6_i32 = arith.constant 6 : i32
    %390 = arith.index_cast %c6_i32 : i32 to index
    %c0_41 = arith.constant 0 : index
    %c0_42 = arith.constant 0 : index
    %391 = vector.load %arg2[%390, %c0_41, %c0_42] : memref<8x8x128xf32, #tpu.memory_space<vmem>>, vector<1x8x128xf32>
    %392 = vector.shape_cast %391 : vector<1x8x128xf32> to vector<8x128xf32>
    %393 = arith.addf %389, %392 : vector<8x128xf32>
    %cst_43 = arith.constant dense<0xFF800000> : vector<128xf32>
    %394 = vector.multi_reduction <maximumf>, %393, %cst_43 [0] : vector<8x128xf32> to vector<128xf32>
    %395 = vector.shape_cast %394 : vector<128xf32> to vector<1x128xf32>
    %396 = vector.broadcast %395 : vector<1x128xf32> to vector<8x128xf32>
    %397 = arith.subf %393, %396 : vector<8x128xf32>
    %398 = math.exp %397 : vector<8x128xf32>
    %399 = vector.extract_strided_slice %398 {offsets = [0, 0], sizes = [1, 128], strides = [1, 1]} : vector<8x128xf32> to vector<1x128xf32>
    %400 = vector.broadcast %399 : vector<1x128xf32> to vector<8x128xf32>
    %401 = arith.mulf %400, %34 : vector<8x128xf32>
    %402 = vector.extract_strided_slice %398 {offsets = [1, 0], sizes = [1, 128], strides = [1, 1]} : vector<8x128xf32> to vector<1x128xf32>
    %403 = vector.broadcast %402 : vector<1x128xf32> to vector<8x128xf32>
    %404 = arith.mulf %403, %40 : vector<8x128xf32>
    %405 = arith.addf %401, %404 : vector<8x128xf32>
    %406 = vector.extract_strided_slice %398 {offsets = [2, 0], sizes = [1, 128], strides = [1, 1]} : vector<8x128xf32> to vector<1x128xf32>
    %407 = vector.broadcast %406 : vector<1x128xf32> to vector<8x128xf32>
    %408 = arith.mulf %407, %46 : vector<8x128xf32>
    %409 = arith.addf %405, %408 : vector<8x128xf32>
    %410 = vector.extract_strided_slice %398 {offsets = [3, 0], sizes = [1, 128], strides = [1, 1]} : vector<8x128xf32> to vector<1x128xf32>
    %411 = vector.broadcast %410 : vector<1x128xf32> to vector<8x128xf32>
    %412 = arith.mulf %411, %52 : vector<8x128xf32>
    %413 = arith.addf %409, %412 : vector<8x128xf32>
    %414 = vector.extract_strided_slice %398 {offsets = [4, 0], sizes = [1, 128], strides = [1, 1]} : vector<8x128xf32> to vector<1x128xf32>
    %415 = vector.broadcast %414 : vector<1x128xf32> to vector<8x128xf32>
    %416 = arith.mulf %415, %58 : vector<8x128xf32>
    %417 = arith.addf %413, %416 : vector<8x128xf32>
    %418 = vector.extract_strided_slice %398 {offsets = [5, 0], sizes = [1, 128], strides = [1, 1]} : vector<8x128xf32> to vector<1x128xf32>
    %419 = vector.broadcast %418 : vector<1x128xf32> to vector<8x128xf32>
    %420 = arith.mulf %419, %64 : vector<8x128xf32>
    %421 = arith.addf %417, %420 : vector<8x128xf32>
    %422 = vector.extract_strided_slice %398 {offsets = [6, 0], sizes = [1, 128], strides = [1, 1]} : vector<8x128xf32> to vector<1x128xf32>
    %423 = vector.broadcast %422 : vector<1x128xf32> to vector<8x128xf32>
    %424 = arith.mulf %423, %70 : vector<8x128xf32>
    %425 = arith.addf %421, %424 : vector<8x128xf32>
    %426 = vector.extract_strided_slice %398 {offsets = [7, 0], sizes = [1, 128], strides = [1, 1]} : vector<8x128xf32> to vector<1x128xf32>
    %427 = vector.broadcast %426 : vector<1x128xf32> to vector<8x128xf32>
    %428 = arith.mulf %427, %76 : vector<8x128xf32>
    %429 = arith.addf %425, %428 : vector<8x128xf32>
    %430 = vector.broadcast %395 : vector<1x128xf32> to vector<8x128xf32>
    %431 = arith.addf %430, %28 : vector<8x128xf32>
    %432 = math.log %429 : vector<8x128xf32>
    %433 = arith.addf %431, %432 : vector<8x128xf32>
    %434 = arith.index_cast %c6_i32 : i32 to index
    %c0_44 = arith.constant 0 : index
    %c0_45 = arith.constant 0 : index
    %435 = vector.load %arg3[%434, %c0_44, %c0_45] : memref<8x1x128xf32, #tpu.memory_space<vmem>>, vector<1x1x128xf32>
    %436 = vector.shape_cast %435 : vector<1x1x128xf32> to vector<1x128xf32>
    %cst_46 = arith.constant 0.000000e+00 : f32
    %437 = vector.broadcast %cst_46 : f32 to vector<1x128xf32>
    %438 = arith.cmpf one, %436, %437 : vector<1x128xf32>
    %439 = vector.shape_cast %438 : vector<1x128xi1> to vector<1x128xi1>
    %440 = vector.broadcast %439 : vector<1x128xi1> to vector<8x128xi1>
    %441 = arith.select %440, %433, %389 : vector<8x128xi1>, vector<8x128xf32>
    %c7_i32 = arith.constant 7 : i32
    %442 = arith.index_cast %c7_i32 : i32 to index
    %c0_47 = arith.constant 0 : index
    %c0_48 = arith.constant 0 : index
    %443 = vector.load %arg2[%442, %c0_47, %c0_48] : memref<8x8x128xf32, #tpu.memory_space<vmem>>, vector<1x8x128xf32>
    %444 = vector.shape_cast %443 : vector<1x8x128xf32> to vector<8x128xf32>
    %445 = arith.addf %441, %444 : vector<8x128xf32>
    %cst_49 = arith.constant dense<0xFF800000> : vector<128xf32>
    %446 = vector.multi_reduction <maximumf>, %445, %cst_49 [0] : vector<8x128xf32> to vector<128xf32>
    %447 = vector.shape_cast %446 : vector<128xf32> to vector<1x128xf32>
    %448 = vector.broadcast %447 : vector<1x128xf32> to vector<8x128xf32>
    %449 = arith.subf %445, %448 : vector<8x128xf32>
    %450 = math.exp %449 : vector<8x128xf32>
    %451 = vector.extract_strided_slice %450 {offsets = [0, 0], sizes = [1, 128], strides = [1, 1]} : vector<8x128xf32> to vector<1x128xf32>
    %452 = vector.broadcast %451 : vector<1x128xf32> to vector<8x128xf32>
    %453 = arith.mulf %452, %34 : vector<8x128xf32>
    %454 = vector.extract_strided_slice %450 {offsets = [1, 0], sizes = [1, 128], strides = [1, 1]} : vector<8x128xf32> to vector<1x128xf32>
    %455 = vector.broadcast %454 : vector<1x128xf32> to vector<8x128xf32>
    %456 = arith.mulf %455, %40 : vector<8x128xf32>
    %457 = arith.addf %453, %456 : vector<8x128xf32>
    %458 = vector.extract_strided_slice %450 {offsets = [2, 0], sizes = [1, 128], strides = [1, 1]} : vector<8x128xf32> to vector<1x128xf32>
    %459 = vector.broadcast %458 : vector<1x128xf32> to vector<8x128xf32>
    %460 = arith.mulf %459, %46 : vector<8x128xf32>
    %461 = arith.addf %457, %460 : vector<8x128xf32>
    %462 = vector.extract_strided_slice %450 {offsets = [3, 0], sizes = [1, 128], strides = [1, 1]} : vector<8x128xf32> to vector<1x128xf32>
    %463 = vector.broadcast %462 : vector<1x128xf32> to vector<8x128xf32>
    %464 = arith.mulf %463, %52 : vector<8x128xf32>
    %465 = arith.addf %461, %464 : vector<8x128xf32>
    %466 = vector.extract_strided_slice %450 {offsets = [4, 0], sizes = [1, 128], strides = [1, 1]} : vector<8x128xf32> to vector<1x128xf32>
    %467 = vector.broadcast %466 : vector<1x128xf32> to vector<8x128xf32>
    %468 = arith.mulf %467, %58 : vector<8x128xf32>
    %469 = arith.addf %465, %468 : vector<8x128xf32>
    %470 = vector.extract_strided_slice %450 {offsets = [5, 0], sizes = [1, 128], strides = [1, 1]} : vector<8x128xf32> to vector<1x128xf32>
    %471 = vector.broadcast %470 : vector<1x128xf32> to vector<8x128xf32>
    %472 = arith.mulf %471, %64 : vector<8x128xf32>
    %473 = arith.addf %469, %472 : vector<8x128xf32>
    %474 = vector.extract_strided_slice %450 {offsets = [6, 0], sizes = [1, 128], strides = [1, 1]} : vector<8x128xf32> to vector<1x128xf32>
    %475 = vector.broadcast %474 : vector<1x128xf32> to vector<8x128xf32>
    %476 = arith.mulf %475, %70 : vector<8x128xf32>
    %477 = arith.addf %473, %476 : vector<8x128xf32>
    %478 = vector.extract_strided_slice %450 {offsets = [7, 0], sizes = [1, 128], strides = [1, 1]} : vector<8x128xf32> to vector<1x128xf32>
    %479 = vector.broadcast %478 : vector<1x128xf32> to vector<8x128xf32>
    %480 = arith.mulf %479, %76 : vector<8x128xf32>
    %481 = arith.addf %477, %480 : vector<8x128xf32>
    %482 = vector.broadcast %447 : vector<1x128xf32> to vector<8x128xf32>
    %483 = arith.addf %482, %28 : vector<8x128xf32>
    %484 = math.log %481 : vector<8x128xf32>
    %485 = arith.addf %483, %484 : vector<8x128xf32>
    %486 = arith.index_cast %c7_i32 : i32 to index
    %c0_50 = arith.constant 0 : index
    %c0_51 = arith.constant 0 : index
    %487 = vector.load %arg3[%486, %c0_50, %c0_51] : memref<8x1x128xf32, #tpu.memory_space<vmem>>, vector<1x1x128xf32>
    %488 = vector.shape_cast %487 : vector<1x1x128xf32> to vector<1x128xf32>
    %cst_52 = arith.constant 0.000000e+00 : f32
    %489 = vector.broadcast %cst_52 : f32 to vector<1x128xf32>
    %490 = arith.cmpf one, %488, %489 : vector<1x128xf32>
    %491 = vector.shape_cast %490 : vector<1x128xi1> to vector<1x128xi1>
    %492 = vector.broadcast %491 : vector<1x128xi1> to vector<8x128xi1>
    %493 = arith.select %492, %485, %441 : vector<8x128xi1>, vector<8x128xf32>
    %c8_i32 = arith.constant 8 : i32
    %c0_53 = arith.constant 0 : index
    %c0_54 = arith.constant 0 : index
    %494 = vector.load %arg8[%c0_53, %c0_54] : memref<8x128xf32, #tpu.memory_space<vmem>>, vector<8x128xf32>
    tpu.vector_store %arg8[%c0_53, %c0_54], %493 {strides = array<i32>} : memref<8x128xf32, #tpu.memory_space<vmem>>, vector<8x128xf32>,
    %c0_i32_55 = arith.constant 0 : i32
    %495 = arith.cmpi eq, %arg1, %c0_i32_55 : i32
    %496 = arith.extui %495 : i1 to i32
    %c0_i32_56 = arith.constant 0 : i32
    %497 = arith.cmpi ne, %496, %c0_i32_56 : i32
    scf.if %497 {
      %c0_57 = arith.constant 0 : index
      %c0_58 = arith.constant 0 : index
      %498 = vector.load %arg8[%c0_57, %c0_58] : memref<8x128xf32, #tpu.memory_space<vmem>>, vector<8x128xf32>
      %c0_59 = arith.constant 0 : index
      %c0_60 = arith.constant 0 : index
      %499 = vector.load %arg5[%c0_59, %c0_60] : memref<8x1xf32, #tpu.memory_space<vmem>>, vector<8x1xf32>
      %500 = vector.broadcast %499 : vector<8x1xf32> to vector<8x128xf32>
      %501 = arith.addf %498, %500 : vector<8x128xf32>
      %cst_61 = arith.constant dense<0xFF800000> : vector<128xf32>
      %502 = vector.multi_reduction <maximumf>, %501, %cst_61 [0] : vector<8x128xf32> to vector<128xf32>
      %503 = vector.shape_cast %502 : vector<128xf32> to vector<1x128xf32>
      %504 = vector.broadcast %503 : vector<1x128xf32> to vector<8x128xf32>
      %505 = arith.subf %501, %504 : vector<8x128xf32>
      %506 = math.exp %505 : vector<8x128xf32>
      %cst_62 = arith.constant dense<0.000000e+00> : vector<128xf32>
      %507 = vector.multi_reduction <add>, %506, %cst_62 [0] : vector<8x128xf32> to vector<128xf32>
      %508 = vector.shape_cast %507 : vector<128xf32> to vector<1x128xf32>
      %509 = math.log %508 : vector<1x128xf32>
      %510 = arith.addf %503, %509 : vector<1x128xf32>
      %c0_63 = arith.constant 0 : index
      %c0_64 = arith.constant 0 : index
      %511 = vector.load %arg7[%c0_63, %c0_64] : memref<1x128xf32, #tpu.memory_space<vmem>>, vector<1x128xf32>
      tpu.vector_store %arg7[%c0_63, %c0_64], %510 {strides = array<i32>} : memref<1x128xf32, #tpu.memory_space<vmem>>, vector<1x128xf32>,
    } else {
    }
    return
  }
  func.func @transform_0(%arg0: i32, %arg1: i32) -> (i32, i32, i32) {
    %c0_i32 = arith.constant 0 : i32
    %c0_i32_0 = arith.constant 0 : i32
    return %arg1, %c0_i32, %arg0 : i32, i32, i32
  }
  func.func @transform_1(%arg0: i32, %arg1: i32) -> (i32, i32, i32) {
    %c0_i32 = arith.constant 0 : i32
    %c0_i32_0 = arith.constant 0 : i32
    return %arg1, %c0_i32, %arg0 : i32, i32, i32
  }
  func.func @transform_2(%arg0: i32, %arg1: i32) -> (i32, i32) {
    %c0_i32 = arith.constant 0 : i32
    %c0_i32_0 = arith.constant 0 : i32
    %c0_i32_1 = arith.constant 0 : i32
    return %c0_i32, %c0_i32_0 : i32, i32
  }
  func.func @transform_3(%arg0: i32, %arg1: i32) -> (i32, i32) {
    %c0_i32 = arith.constant 0 : i32
    %c0_i32_0 = arith.constant 0 : i32
    %c0_i32_1 = arith.constant 0 : i32
    return %c0_i32, %c0_i32_0 : i32, i32
  }
  func.func @transform_4(%arg0: i32, %arg1: i32) -> (i32, i32, i32) {
    %c0_i32 = arith.constant 0 : i32
    %c0_i32_0 = arith.constant 0 : i32
    %c0_i32_1 = arith.constant 0 : i32
    %c0_i32_2 = arith.constant 0 : i32
    return %c0_i32, %c0_i32_0, %c0_i32_1 : i32, i32, i32
  }
  func.func @transform_5(%arg0: i32, %arg1: i32) -> (i32, i32) {
    %c0_i32 = arith.constant 0 : i32
    %c0_i32_0 = arith.constant 0 : i32
    return %c0_i32, %arg0 : i32, i32
  }
}

</mosaic_0001>

<llo_original>
// kernel: crf_forward_alg.2
$region0: #{crf_forward_alg.2}
  #allocation0 [shape = 'u32[]', space=smem, size = 0x4, offset = 0x4, fixed_abs, tag = 'smem constant byte address 0x4 - core index']
  #allocation1 [shape = 'u32[144,128]{1,0:T(1,128)}', space=vmem, size = 0x12000, scoped, tag = 'internal scratch']
  #allocation2 [shape = 'f32[8,128]{1,0:T(8,128)}', space=vmem, size = 0x1000, scoped, tag = 'scratch operand']
  #allocation3 [shape = 'u32[2048]{0}', space=vmem, size = 0x2000, scoped, tag = 'scoped memory for crf_forward_alg.2']
  #allocation4 [shape = 'u32[2048]{0}', space=vmem, size = 0x2000, scoped, tag = 'scoped memory for crf_forward_alg.2']
  #allocation5 [shape = 'u32[2048]{0}', space=vmem, size = 0x2000, scoped, tag = 'scoped memory for crf_forward_alg.2']
  #allocation6 [shape = 'u32[2048]{0}', space=vmem, size = 0x2000, scoped, tag = 'scoped memory for crf_forward_alg.2']
  #allocation7 [shape = 'u32[2048]{0}', space=vmem, size = 0x2000, scoped, tag = 'scoped memory for crf_forward_alg.2']
  %s0 = inlined_call_operand.vmem [shape: f32[8,1,128], index: 0, kind: input, shape index: {}]
  %s1 = inlined_call_operand.vmem [shape: f32[8,1], index: 1, kind: input, shape index: {}]
  %s2 = inlined_call_operand.vmem [shape: f32[8,1], index: 2, kind: input, shape index: {}]
  %s3 = inlined_call_operand.vmem [shape: f32[8,8,1], index: 3, kind: input, shape index: {}]
  %s4 = inlined_call_operand.vmem [shape: f32[8,8,2], index: 4, kind: input, shape index: {}]
  %s5 = inlined_call_operand.<no memory space> [shape: f32[], index: 5, kind: input, shape index: {}]
  %s6 = inlined_call_operand.vmem [shape: f32[1,128], index: 6, kind: output, shape index: {}]
  %s7 = sld [smem:[#allocation0]]
  $region38: #{crf_forward_alg.2} parent=0
    _
  %s9 = ssub.s32 1, %s7
  %s10 = scalar_select 0, %s9, %s7
  %v11 = vstv %s5
  $region1: #{crf_forward_alg.2} parent=0
    #allocation8 [shape = 'u8[32768]{0}', space=vmem, size = 0x8000, dematerialized = true, scoped, tag = 'FusionAdapter Buffer %fusion.1 = f32[8,8,128]{2,1,0:T(8,128)} fusion(%param_4.1, %param_5), kind=kLoop, calls=%fused_computation.1.clone, metadata={op_name="jit(crf_forward_alg)/jit(_pad)/pad" stack_frame_id=12}']
    // Predicated region
    $region2: #{crf_forward_alg.2} parent=1 // pred_check
      _
    $region3: #{crf_forward_alg.2} parent=1 // pred_check_branch
      %13 = sbr.rel (0) target = $region5
    $region4: #{crf_forward_alg.2} parent=1 // pred_region
      _
    $region5: #{crf_forward_alg.2} parent=1 // pred_fallthru
      _
    // Predicated region
    $region6: #{crf_forward_alg.2} parent=1 // pred_check
      _
    $region7: #{crf_forward_alg.2} parent=1 // pred_check_branch
      %15 = sbr.rel (0) target = $region9
    $region8: #{crf_forward_alg.2} parent=1 // pred_region
      _
    $region9: #{crf_forward_alg.2} parent=1 // pred_fallthru
      _
    // Predicated region
    $region10: #{crf_forward_alg.2} parent=1 // pred_check
      _
    $region11: #{crf_forward_alg.2} parent=1 // pred_check_branch
      %17 = sbr.rel (0) target = $region13
    $region12: #{crf_forward_alg.2} parent=1 // pred_region
      _
    $region13: #{crf_forward_alg.2} parent=1 // pred_fallthru
      _
    // Predicated region
    $region14: #{crf_forward_alg.2} parent=1 // pred_check
      _
    $region15: #{crf_forward_alg.2} parent=1 // pred_check_branch
      %19 = sbr.rel (0) target = $region17
    $region16: #{crf_forward_alg.2} parent=1 // pred_region
      _
    $region17: #{crf_forward_alg.2} parent=1 // pred_fallthru
      _
    // Predicated region
    $region18: #{crf_forward_alg.2} parent=1 // pred_check
      _
    $region19: #{crf_forward_alg.2} parent=1 // pred_check_branch
      %21 = sbr.rel (0) target = $region21
    $region20: #{crf_forward_alg.2} parent=1 // pred_region
      _
    $region21: #{crf_forward_alg.2} parent=1 // pred_fallthru
      _
    %v22 = vld [vmem:[%s4] sm:$0xff]
    %v23 = vlaneseq
    %v24 = vand.u32 %v23, 127
    %vm26 = vcmp.lt.s32.totalorder %v24, 2
    %v27 = vsel %vm26, %v22, %v11
    %s29 = ssub.s32 256, 1
    %30 = vst [vmem:[#allocation8] sm:%s29] %v27
    %s31 = scalar_lea.vmem %s4, 8
    %v32 = vld [vmem:[%s31] sm:$0xff]
    %v33 = vlaneseq
    %v34 = vand.u32 %v33, 127
    %vm36 = vcmp.lt.s32.totalorder %v34, 2
    %v37 = vsel %vm36, %v32, %v11
    %s38 = scalar_lea.vmem [#allocation8], 8
    %s40 = ssub.s32 256, 1
    %41 = vst [vmem:[%s38] sm:%s40] %v37
    %s42 = scalar_lea.vmem %s4, 16
    %v43 = vld [vmem:[%s42] sm:$0xff]
    %v44 = vlaneseq
    %v45 = vand.u32 %v44, 127
    %vm47 = vcmp.lt.s32.totalorder %v45, 2
    %v48 = vsel %vm47, %v43, %v11
    %s49 = scalar_lea.vmem [#allocation8], 16
    %s51 = ssub.s32 256, 1
    %52 = vst [vmem:[%s49] sm:%s51] %v48
    %s53 = scalar_lea.vmem %s4, 24
    %v54 = vld [vmem:[%s53] sm:$0xff]
    %v55 = vlaneseq
    %v56 = vand.u32 %v55, 127
    %vm58 = vcmp.lt.s32.totalorder %v56, 2
    %v59 = vsel %vm58, %v54, %v11
    %s60 = scalar_lea.vmem [#allocation8], 24
    %s62 = ssub.s32 256, 1
    %63 = vst [vmem:[%s60] sm:%s62] %v59
    %s64 = scalar_lea.vmem %s4, 32
    %v65 = vld [vmem:[%s64] sm:$0xff]
    %v66 = vlaneseq
    %v67 = vand.u32 %v66, 127
    %vm69 = vcmp.lt.s32.totalorder %v67, 2
    %v70 = vsel %vm69, %v65, %v11
    %s71 = scalar_lea.vmem [#allocation8], 32
    %s73 = ssub.s32 256, 1
    %74 = vst [vmem:[%s71] sm:%s73] %v70
    %s75 = scalar_lea.vmem %s4, 40
    %v76 = vld [vmem:[%s75] sm:$0xff]
    %v77 = vlaneseq
    %v78 = vand.u32 %v77, 127
    %vm80 = vcmp.lt.s32.totalorder %v78, 2
    %v81 = vsel %vm80, %v76, %v11
    %s82 = scalar_lea.vmem [#allocation8], 40
    %s84 = ssub.s32 256, 1
    %85 = vst [vmem:[%s82] sm:%s84] %v81
    %s86 = scalar_lea.vmem %s4, 48
    %v87 = vld [vmem:[%s86] sm:$0xff]
    %v88 = vlaneseq
    %v89 = vand.u32 %v88, 127
    %vm91 = vcmp.lt.s32.totalorder %v89, 2
    %v92 = vsel %vm91, %v87, %v11
    %s93 = scalar_lea.vmem [#allocation8], 48
    %s95 = ssub.s32 256, 1
    %96 = vst [vmem:[%s93] sm:%s95] %v92
    %s97 = scalar_lea.vmem %s4, 56
    %v98 = vld [vmem:[%s97] sm:$0xff]
    %v99 = vlaneseq
    %v100 = vand.u32 %v99, 127
    %vm102 = vcmp.lt.s32.totalorder %v100, 2
    %v103 = vsel %vm102, %v98, %v11
    %s104 = scalar_lea.vmem [#allocation8], 56
    %s106 = ssub.s32 256, 1
    %107 = vst [vmem:[%s104] sm:%s106] %v103
    %p108 = scmp.eq.s32.totalorder 0, 0
    // Predicated region
    $region22: #{crf_forward_alg.2} parent=1 // pred_check
      %p109 = pneg %p108
    $region23: #{crf_forward_alg.2} parent=1 // pred_check_branch
      %111 = sbr.rel (%p109) target = $region25
    $region24: #{crf_forward_alg.2} parent=1 // pred_region
      %v112 = vld [vmem:[%s1] sm:$0xff]
      %114 = vset.pattern.permute.xlu0 0
      %115 = vperm.xlu0 %114, %v112
      %v116 = vpop.permute.xlu0 %115
      %118 = vst [vmem:[#allocation2] sm:$0xff] %v116
    $region25: #{crf_forward_alg.2} parent=1 // pred_fallthru
      _
    %v119 = vld [vmem:[%s3] sm:$0xff]
    %v120 = vld [vmem:[%s3 + $0x8] sm:$0xff]
    %v121 = vld [vmem:[%s3 + $0x10] sm:$0xff]
    %v122 = vld [vmem:[%s3 + $0x18] sm:$0xff]
    %v123 = vld [vmem:[%s3 + $0x20] sm:$0xff]
    %v124 = vld [vmem:[%s3 + $0x28] sm:$0xff]
    %v125 = vld [vmem:[%s3 + $0x30] sm:$0xff]
    %v126 = vld [vmem:[%s3 + $0x38] sm:$0xff]
    %v127 = vmax.f32 %v119, %v120
    %v128 = vmax.f32 %v127, %v121
    %v129 = vmax.f32 %v128, %v122
    %v130 = vmax.f32 %v129, %v123
    %v131 = vmax.f32 %v130, %v124
    %v132 = vmax.f32 %v131, %v125
    %v133 = vmax.f32 %v132, %v126
    %135 = vset.pattern.permute.xlu0 0
    %136 = vperm.xlu0 %135, %v133
    %v137 = vpop.permute.xlu0 %136
    %v139 = vsub.f32 %v119, %v133
    %v140 = vmul.f32 %v139, 1.442695
    %v141 = vpow.pop %v140
    %143 = vset.pattern.permute.xlu0 0
    %144 = vperm.xlu0 %143, %v141
    %v145 = vpop.permute.xlu0 %144
    %v147 = vsub.f32 %v120, %v133
    %v148 = vmul.f32 %v147, 1.442695
    %v149 = vpow.pop %v148
    %151 = vset.pattern.permute.xlu0 0
    %152 = vperm.xlu0 %151, %v149
    %v153 = vpop.permute.xlu0 %152
    %v155 = vsub.f32 %v121, %v133
    %v156 = vmul.f32 %v155, 1.442695
    %v157 = vpow.pop %v156
    %159 = vset.pattern.permute.xlu0 0
    %160 = vperm.xlu0 %159, %v157
    %v161 = vpop.permute.xlu0 %160
    %v163 = vsub.f32 %v122, %v133
    %v164 = vmul.f32 %v163, 1.442695
    %v165 = vpow.pop %v164
    %167 = vset.pattern.permute.xlu0 0
    %168 = vperm.xlu0 %167, %v165
    %v169 = vpop.permute.xlu0 %168
    %v171 = vsub.f32 %v123, %v133
    %v172 = vmul.f32 %v171, 1.442695
    %v173 = vpow.pop %v172
    %175 = vset.pattern.permute.xlu0 0
    %176 = vperm.xlu0 %175, %v173
    %v177 = vpop.permute.xlu0 %176
    %v179 = vsub.f32 %v124, %v133
    %v180 = vmul.f32 %v179, 1.442695
    %v181 = vpow.pop %v180
    %183 = vset.pattern.permute.xlu0 0
    %184 = vperm.xlu0 %183, %v181
    %v185 = vpop.permute.xlu0 %184
    %v187 = vsub.f32 %v125, %v133
    %v188 = vmul.f32 %v187, 1.442695
    %v189 = vpow.pop %v188
    %191 = vset.pattern.permute.xlu0 0
    %192 = vperm.xlu0 %191, %v189
    %v193 = vpop.permute.xlu0 %192
    %v195 = vsub.f32 %v126, %v133
    %v196 = vmul.f32 %v195, 1.442695
    %v197 = vpow.pop %v196
    %199 = vset.pattern.permute.xlu0 0
    %200 = vperm.xlu0 %199, %v197
    %v201 = vpop.permute.xlu0 %200
    %v203 = vld [vmem:[#allocation2] sm:$0xff]
    %v204 = vld [vmem:[#allocation8] sm:$0xff]
    %v205 = vadd.f32 %v203, %v204
    %v206 = vrot.slane %v205, 4
    %v207 = vmax.f32 %v205, %v206
    %v208 = vrot.slane %v207, 2
    %v209 = vmax.f32 %v207, %v208
    %v210 = vrot.slane %v209, 1
    %v211 = vmax.f32 %v209, %v210
    %v212 = vsub.f32 %v205, %v211
    %v213 = vmul.f32 %v212, 1.442695
    %v214 = vpow.pop %v213
    %v215 = vlaneseq
    %v216 = vshrl.u32 %v215, 7
    %v217 = vsub.s32 0, %v216
    %v218 = vrot.slane %v214, %v217
    %v219 = vmul.f32 %v218, %v145
    %v220 = vlaneseq
    %v221 = vshrl.u32 %v220, 7
    %v222 = vsub.s32 1, %v221
    %v223 = vrot.slane %v214, %v222
    %v224 = vmul.f32 %v223, %v153
    %v225 = vadd.f32 %v219, %v224
    %v226 = vlaneseq
    %v227 = vshrl.u32 %v226, 7
    %v228 = vsub.s32 2, %v227
    %v229 = vrot.slane %v214, %v228
    %v230 = vmul.f32 %v229, %v161
    %v231 = vadd.f32 %v225, %v230
    %v232 = vlaneseq
    %v233 = vshrl.u32 %v232, 7
    %v234 = vsub.s32 3, %v233
    %v235 = vrot.slane %v214, %v234
    %v236 = vmul.f32 %v235, %v169
    %v237 = vadd.f32 %v231, %v236
    %v238 = vlaneseq
    %v239 = vshrl.u32 %v238, 7
    %v240 = vsub.s32 4, %v239
    %v241 = vrot.slane %v214, %v240
    %v242 = vmul.f32 %v241, %v177
    %v243 = vadd.f32 %v237, %v242
    %v244 = vlaneseq
    %v245 = vshrl.u32 %v244, 7
    %v246 = vsub.s32 5, %v245
    %v247 = vrot.slane %v214, %v246
    %v248 = vmul.f32 %v247, %v185
    %v249 = vadd.f32 %v243, %v248
    %v250 = vlaneseq
    %v251 = vshrl.u32 %v250, 7
    %v252 = vsub.s32 6, %v251
    %v253 = vrot.slane %v214, %v252
    %v254 = vmul.f32 %v253, %v193
    %v255 = vadd.f32 %v249, %v254
    %v256 = vlaneseq
    %v257 = vshrl.u32 %v256, 7
    %v258 = vsub.s32 7, %v257
    %v259 = vrot.slane %v214, %v258
    %v260 = vmul.f32 %v259, %v201
    %v261 = vadd.f32 %v255, %v260
    %v262 = vadd.f32 %v211, %v137
    %v263 = vlog2.pop %v261
    %v264 = vmul.f32 %v263, 0.6931472
    %v265 = vadd.f32 %v262, %v264
    %v266 = vld [vmem:[%s0] sm:$0x1]
    %vm267 = vcmp.ne.f32.partialorder %v266, 0.0
    %v268 = vsel %vm267, 1, 0
    %v269 = vlaneseq
    %v270 = vshrl.u32 %v269, 7
    %v271 = vsub.s32 0, %v270
    %v272 = vrot.slane %v268, %v271
    %vm273 = vcmp.eq.s32.totalorder %v272, 1
    %v274 = vsel %vm273, %v265, %v203
    %s275 = scalar_lea.vmem [#allocation8], 8
    %v276 = vld [vmem:[%s275] sm:$0xff]
    %v277 = vadd.f32 %v274, %v276
    %v278 = vrot.slane %v277, 4
    %v279 = vmax.f32 %v277, %v278
    %v280 = vrot.slane %v279, 2
    %v281 = vmax.f32 %v279, %v280
    %v282 = vrot.slane %v281, 1
    %v283 = vmax.f32 %v281, %v282
    %v284 = vsub.f32 %v277, %v283
    %v285 = vmul.f32 %v284, 1.442695
    %v286 = vpow.pop %v285
    %v287 = vlaneseq
    %v288 = vshrl.u32 %v287, 7
    %v289 = vsub.s32 0, %v288
    %v290 = vrot.slane %v286, %v289
    %v291 = vmul.f32 %v290, %v145
    %v292 = vlaneseq
    %v293 = vshrl.u32 %v292, 7
    %v294 = vsub.s32 1, %v293
    %v295 = vrot.slane %v286, %v294
    %v296 = vmul.f32 %v295, %v153
    %v297 = vadd.f32 %v291, %v296
    %v298 = vlaneseq
    %v299 = vshrl.u32 %v298, 7
    %v300 = vsub.s32 2, %v299
    %v301 = vrot.slane %v286, %v300
    %v302 = vmul.f32 %v301, %v161
    %v303 = vadd.f32 %v297, %v302
    %v304 = vlaneseq
    %v305 = vshrl.u32 %v304, 7
    %v306 = vsub.s32 3, %v305
    %v307 = vrot.slane %v286, %v306
    %v308 = vmul.f32 %v307, %v169
    %v309 = vadd.f32 %v303, %v308
    %v310 = vlaneseq
    %v311 = vshrl.u32 %v310, 7
    %v312 = vsub.s32 4, %v311
    %v313 = vrot.slane %v286, %v312
    %v314 = vmul.f32 %v313, %v177
    %v315 = vadd.f32 %v309, %v314
    %v316 = vlaneseq
    %v317 = vshrl.u32 %v316, 7
    %v318 = vsub.s32 5, %v317
    %v319 = vrot.slane %v286, %v318
    %v320 = vmul.f32 %v319, %v185
    %v321 = vadd.f32 %v315, %v320
    %v322 = vlaneseq
    %v323 = vshrl.u32 %v322, 7
    %v324 = vsub.s32 6, %v323
    %v325 = vrot.slane %v286, %v324
    %v326 = vmul.f32 %v325, %v193
    %v327 = vadd.f32 %v321, %v326
    %v328 = vlaneseq
    %v329 = vshrl.u32 %v328, 7
    %v330 = vsub.s32 7, %v329
    %v331 = vrot.slane %v286, %v330
    %v332 = vmul.f32 %v331, %v201
    %v333 = vadd.f32 %v327, %v332
    %v334 = vadd.f32 %v283, %v137
    %v335 = vlog2.pop %v333
    %v336 = vmul.f32 %v335, 0.6931472
    %v337 = vadd.f32 %v334, %v336
    %s338 = scalar_lea.vmem %s0, 1
    %v339 = vld [vmem:[%s338] sm:$0x1]
    %vm340 = vcmp.ne.f32.partialorder %v339, 0.0
    %v341 = vsel %vm340, 1, 0
    %v342 = vlaneseq
    %v343 = vshrl.u32 %v342, 7
    %v344 = vsub.s32 0, %v343
    %v345 = vrot.slane %v341, %v344
    %vm346 = vcmp.eq.s32.totalorder %v345, 1
    %v347 = vsel %vm346, %v337, %v274
    %s348 = scalar_lea.vmem [#allocation8], 16
    %v349 = vld [vmem:[%s348] sm:$0xff]
    %v350 = vadd.f32 %v347, %v349
    %v351 = vrot.slane %v350, 4
    %v352 = vmax.f32 %v350, %v351
    %v353 = vrot.slane %v352, 2
    %v354 = vmax.f32 %v352, %v353
    %v355 = vrot.slane %v354, 1
    %v356 = vmax.f32 %v354, %v355
    %v357 = vsub.f32 %v350, %v356
    %v358 = vmul.f32 %v357, 1.442695
    %v359 = vpow.pop %v358
    %v360 = vlaneseq
    %v361 = vshrl.u32 %v360, 7
    %v362 = vsub.s32 0, %v361
    %v363 = vrot.slane %v359, %v362
    %v364 = vmul.f32 %v363, %v145
    %v365 = vlaneseq
    %v366 = vshrl.u32 %v365, 7
    %v367 = vsub.s32 1, %v366
    %v368 = vrot.slane %v359, %v367
    %v369 = vmul.f32 %v368, %v153
    %v370 = vadd.f32 %v364, %v369
    %v371 = vlaneseq
    %v372 = vshrl.u32 %v371, 7
    %v373 = vsub.s32 2, %v372
    %v374 = vrot.slane %v359, %v373
    %v375 = vmul.f32 %v374, %v161
    %v376 = vadd.f32 %v370, %v375
    %v377 = vlaneseq
    %v378 = vshrl.u32 %v377, 7
    %v379 = vsub.s32 3, %v378
    %v380 = vrot.slane %v359, %v379
    %v381 = vmul.f32 %v380, %v169
    %v382 = vadd.f32 %v376, %v381
    %v383 = vlaneseq
    %v384 = vshrl.u32 %v383, 7
    %v385 = vsub.s32 4, %v384
    %v386 = vrot.slane %v359, %v385
    %v387 = vmul.f32 %v386, %v177
    %v388 = vadd.f32 %v382, %v387
    %v389 = vlaneseq
    %v390 = vshrl.u32 %v389, 7
    %v391 = vsub.s32 5, %v390
    %v392 = vrot.slane %v359, %v391
    %v393 = vmul.f32 %v392, %v185
    %v394 = vadd.f32 %v388, %v393
    %v395 = vlaneseq
    %v396 = vshrl.u32 %v395, 7
    %v397 = vsub.s32 6, %v396
    %v398 = vrot.slane %v359, %v397
    %v399 = vmul.f32 %v398, %v193
    %v400 = vadd.f32 %v394, %v399
    %v401 = vlaneseq
    %v402 = vshrl.u32 %v401, 7
    %v403 = vsub.s32 7, %v402
    %v404 = vrot.slane %v359, %v403
    %v405 = vmul.f32 %v404, %v201
    %v406 = vadd.f32 %v400, %v405
    %v407 = vadd.f32 %v356, %v137
    %v408 = vlog2.pop %v406
    %v409 = vmul.f32 %v408, 0.6931472
    %v410 = vadd.f32 %v407, %v409
    %s411 = scalar_lea.vmem %s0, 2
    %v412 = vld [vmem:[%s411] sm:$0x1]
    %vm413 = vcmp.ne.f32.partialorder %v412, 0.0
    %v414 = vsel %vm413, 1, 0
    %v415 = vlaneseq
    %v416 = vshrl.u32 %v415, 7
    %v417 = vsub.s32 0, %v416
    %v418 = vrot.slane %v414, %v417
    %vm419 = vcmp.eq.s32.totalorder %v418, 1
    %v420 = vsel %vm419, %v410, %v347
    %s421 = scalar_lea.vmem [#allocation8], 24
    %v422 = vld [vmem:[%s421] sm:$0xff]
    %v423 = vadd.f32 %v420, %v422
    %v424 = vrot.slane %v423, 4
    %v425 = vmax.f32 %v423, %v424
    %v426 = vrot.slane %v425, 2
    %v427 = vmax.f32 %v425, %v426
    %v428 = vrot.slane %v427, 1
    %v429 = vmax.f32 %v427, %v428
    %v430 = vsub.f32 %v423, %v429
    %v431 = vmul.f32 %v430, 1.442695
    %v432 = vpow.pop %v431
    %v433 = vlaneseq
    %v434 = vshrl.u32 %v433, 7
    %v435 = vsub.s32 0, %v434
    %v436 = vrot.slane %v432, %v435
    %v437 = vmul.f32 %v436, %v145
    %v438 = vlaneseq
    %v439 = vshrl.u32 %v438, 7
    %v440 = vsub.s32 1, %v439
    %v441 = vrot.slane %v432, %v440
    %v442 = vmul.f32 %v441, %v153
    %v443 = vadd.f32 %v437, %v442
    %v444 = vlaneseq
    %v445 = vshrl.u32 %v444, 7
    %v446 = vsub.s32 2, %v445
    %v447 = vrot.slane %v432, %v446
    %v448 = vmul.f32 %v447, %v161
    %v449 = vadd.f32 %v443, %v448
    %v450 = vlaneseq
    %v451 = vshrl.u32 %v450, 7
    %v452 = vsub.s32 3, %v451
    %v453 = vrot.slane %v432, %v452
    %v454 = vmul.f32 %v453, %v169
    %v455 = vadd.f32 %v449, %v454
    %v456 = vlaneseq
    %v457 = vshrl.u32 %v456, 7
    %v458 = vsub.s32 4, %v457
    %v459 = vrot.slane %v432, %v458
    %v460 = vmul.f32 %v459, %v177
    %v461 = vadd.f32 %v455, %v460
    %v462 = vlaneseq
    %v463 = vshrl.u32 %v462, 7
    %v464 = vsub.s32 5, %v463
    %v465 = vrot.slane %v432, %v464
    %v466 = vmul.f32 %v465, %v185
    %v467 = vadd.f32 %v461, %v466
    %v468 = vlaneseq
    %v469 = vshrl.u32 %v468, 7
    %v470 = vsub.s32 6, %v469
    %v471 = vrot.slane %v432, %v470
    %v472 = vmul.f32 %v471, %v193
    %v473 = vadd.f32 %v467, %v472
    %v474 = vlaneseq
    %v475 = vshrl.u32 %v474, 7
    %v476 = vsub.s32 7, %v475
    %v477 = vrot.slane %v432, %v476
    %v478 = vmul.f32 %v477, %v201
    %v479 = vadd.f32 %v473, %v478
    %v480 = vadd.f32 %v429, %v137
    %v481 = vlog2.pop %v479
    %v482 = vmul.f32 %v481, 0.6931472
    %v483 = vadd.f32 %v480, %v482
    %s484 = scalar_lea.vmem %s0, 3
    %v485 = vld [vmem:[%s484] sm:$0x1]
    %vm486 = vcmp.ne.f32.partialorder %v485, 0.0
    %v487 = vsel %vm486, 1, 0
    %v488 = vlaneseq
    %v489 = vshrl.u32 %v488, 7
    %v490 = vsub.s32 0, %v489
    %v491 = vrot.slane %v487, %v490
    %vm492 = vcmp.eq.s32.totalorder %v491, 1
    %v493 = vsel %vm492, %v483, %v420
    %s494 = scalar_lea.vmem [#allocation8], 32
    %v495 = vld [vmem:[%s494] sm:$0xff]
    %v496 = vadd.f32 %v493, %v495
    %v497 = vrot.slane %v496, 4
    %v498 = vmax.f32 %v496, %v497
    %v499 = vrot.slane %v498, 2
    %v500 = vmax.f32 %v498, %v499
    %v501 = vrot.slane %v500, 1
    %v502 = vmax.f32 %v500, %v501
    %v503 = vsub.f32 %v496, %v502
    %v504 = vmul.f32 %v503, 1.442695
    %v505 = vpow.pop %v504
    %v506 = vlaneseq
    %v507 = vshrl.u32 %v506, 7
    %v508 = vsub.s32 0, %v507
    %v509 = vrot.slane %v505, %v508
    %v510 = vmul.f32 %v509, %v145
    %v511 = vlaneseq
    %v512 = vshrl.u32 %v511, 7
    %v513 = vsub.s32 1, %v512
    %v514 = vrot.slane %v505, %v513
    %v515 = vmul.f32 %v514, %v153
    %v516 = vadd.f32 %v510, %v515
    %v517 = vlaneseq
    %v518 = vshrl.u32 %v517, 7
    %v519 = vsub.s32 2, %v518
    %v520 = vrot.slane %v505, %v519
    %v521 = vmul.f32 %v520, %v161
    %v522 = vadd.f32 %v516, %v521
    %v523 = vlaneseq
    %v524 = vshrl.u32 %v523, 7
    %v525 = vsub.s32 3, %v524
    %v526 = vrot.slane %v505, %v525
    %v527 = vmul.f32 %v526, %v169
    %v528 = vadd.f32 %v522, %v527
    %v529 = vlaneseq
    %v530 = vshrl.u32 %v529, 7
    %v531 = vsub.s32 4, %v530
    %v532 = vrot.slane %v505, %v531
    %v533 = vmul.f32 %v532, %v177
    %v534 = vadd.f32 %v528, %v533
    %v535 = vlaneseq
    %v536 = vshrl.u32 %v535, 7
    %v537 = vsub.s32 5, %v536
    %v538 = vrot.slane %v505, %v537
    %v539 = vmul.f32 %v538, %v185
    %v540 = vadd.f32 %v534, %v539
    %v541 = vlaneseq
    %v542 = vshrl.u32 %v541, 7
    %v543 = vsub.s32 6, %v542
    %v544 = vrot.slane %v505, %v543
    %v545 = vmul.f32 %v544, %v193
    %v546 = vadd.f32 %v540, %v545
    %v547 = vlaneseq
    %v548 = vshrl.u32 %v547, 7
    %v549 = vsub.s32 7, %v548
    %v550 = vrot.slane %v505, %v549
    %v551 = vmul.f32 %v550, %v201
    %v552 = vadd.f32 %v546, %v551
    %v553 = vadd.f32 %v502, %v137
    %v554 = vlog2.pop %v552
    %v555 = vmul.f32 %v554, 0.6931472
    %v556 = vadd.f32 %v553, %v555
    %s557 = scalar_lea.vmem %s0, 4
    %v558 = vld [vmem:[%s557] sm:$0x1]
    %vm559 = vcmp.ne.f32.partialorder %v558, 0.0
    %v560 = vsel %vm559, 1, 0
    %v561 = vlaneseq
    %v562 = vshrl.u32 %v561, 7
    %v563 = vsub.s32 0, %v562
    %v564 = vrot.slane %v560, %v563
    %vm565 = vcmp.eq.s32.totalorder %v564, 1
    %v566 = vsel %vm565, %v556, %v493
    %s567 = scalar_lea.vmem [#allocation8], 40
    %v568 = vld [vmem:[%s567] sm:$0xff]
    %v569 = vadd.f32 %v566, %v568
    %v570 = vrot.slane %v569, 4
    %v571 = vmax.f32 %v569, %v570
    %v572 = vrot.slane %v571, 2
    %v573 = vmax.f32 %v571, %v572
    %v574 = vrot.slane %v573, 1
    %v575 = vmax.f32 %v573, %v574
    %v576 = vsub.f32 %v569, %v575
    %v577 = vmul.f32 %v576, 1.442695
    %v578 = vpow.pop %v577
    %v579 = vlaneseq
    %v580 = vshrl.u32 %v579, 7
    %v581 = vsub.s32 0, %v580
    %v582 = vrot.slane %v578, %v581
    %v583 = vmul.f32 %v582, %v145
    %v584 = vlaneseq
    %v585 = vshrl.u32 %v584, 7
    %v586 = vsub.s32 1, %v585
    %v587 = vrot.slane %v578, %v586
    %v588 = vmul.f32 %v587, %v153
    %v589 = vadd.f32 %v583, %v588
    %v590 = vlaneseq
    %v591 = vshrl.u32 %v590, 7
    %v592 = vsub.s32 2, %v591
    %v593 = vrot.slane %v578, %v592
    %v594 = vmul.f32 %v593, %v161
    %v595 = vadd.f32 %v589, %v594
    %v596 = vlaneseq
    %v597 = vshrl.u32 %v596, 7
    %v598 = vsub.s32 3, %v597
    %v599 = vrot.slane %v578, %v598
    %v600 = vmul.f32 %v599, %v169
    %v601 = vadd.f32 %v595, %v600
    %v602 = vlaneseq
    %v603 = vshrl.u32 %v602, 7
    %v604 = vsub.s32 4, %v603
    %v605 = vrot.slane %v578, %v604
    %v606 = vmul.f32 %v605, %v177
    %v607 = vadd.f32 %v601, %v606
    %v608 = vlaneseq
    %v609 = vshrl.u32 %v608, 7
    %v610 = vsub.s32 5, %v609
    %v611 = vrot.slane %v578, %v610
    %v612 = vmul.f32 %v611, %v185
    %v613 = vadd.f32 %v607, %v612
    %v614 = vlaneseq
    %v615 = vshrl.u32 %v614, 7
    %v616 = vsub.s32 6, %v615
    %v617 = vrot.slane %v578, %v616
    %v618 = vmul.f32 %v617, %v193
    %v619 = vadd.f32 %v613, %v618
    %v620 = vlaneseq
    %v621 = vshrl.u32 %v620, 7
    %v622 = vsub.s32 7, %v621
    %v623 = vrot.slane %v578, %v622
    %v624 = vmul.f32 %v623, %v201
    %v625 = vadd.f32 %v619, %v624
    %v626 = vadd.f32 %v575, %v137
    %v627 = vlog2.pop %v625
    %v628 = vmul.f32 %v627, 0.6931472
    %v629 = vadd.f32 %v626, %v628
    %s630 = scalar_lea.vmem %s0, 5
    %v631 = vld [vmem:[%s630] sm:$0x1]
    %vm632 = vcmp.ne.f32.partialorder %v631, 0.0
    %v633 = vsel %vm632, 1, 0
    %v634 = vlaneseq
    %v635 = vshrl.u32 %v634, 7
    %v636 = vsub.s32 0, %v635
    %v637 = vrot.slane %v633, %v636
    %vm638 = vcmp.eq.s32.totalorder %v637, 1
    %v639 = vsel %vm638, %v629, %v566
    %s640 = scalar_lea.vmem [#allocation8], 48
    %v641 = vld [vmem:[%s640] sm:$0xff]
    %v642 = vadd.f32 %v639, %v641
    %v643 = vrot.slane %v642, 4
    %v644 = vmax.f32 %v642, %v643
    %v645 = vrot.slane %v644, 2
    %v646 = vmax.f32 %v644, %v645
    %v647 = vrot.slane %v646, 1
    %v648 = vmax.f32 %v646, %v647
    %v649 = vsub.f32 %v642, %v648
    %v650 = vmul.f32 %v649, 1.442695
    %v651 = vpow.pop %v650
    %v652 = vlaneseq
    %v653 = vshrl.u32 %v652, 7
    %v654 = vsub.s32 0, %v653
    %v655 = vrot.slane %v651, %v654
    %v656 = vmul.f32 %v655, %v145
    %v657 = vlaneseq
    %v658 = vshrl.u32 %v657, 7
    %v659 = vsub.s32 1, %v658
    %v660 = vrot.slane %v651, %v659
    %v661 = vmul.f32 %v660, %v153
    %v662 = vadd.f32 %v656, %v661
    %v663 = vlaneseq
    %v664 = vshrl.u32 %v663, 7
    %v665 = vsub.s32 2, %v664
    %v666 = vrot.slane %v651, %v665
    %v667 = vmul.f32 %v666, %v161
    %v668 = vadd.f32 %v662, %v667
    %v669 = vlaneseq
    %v670 = vshrl.u32 %v669, 7
    %v671 = vsub.s32 3, %v670
    %v672 = vrot.slane %v651, %v671
    %v673 = vmul.f32 %v672, %v169
    %v674 = vadd.f32 %v668, %v673
    %v675 = vlaneseq
    %v676 = vshrl.u32 %v675, 7
    %v677 = vsub.s32 4, %v676
    %v678 = vrot.slane %v651, %v677
    %v679 = vmul.f32 %v678, %v177
    %v680 = vadd.f32 %v674, %v679
    %v681 = vlaneseq
    %v682 = vshrl.u32 %v681, 7
    %v683 = vsub.s32 5, %v682
    %v684 = vrot.slane %v651, %v683
    %v685 = vmul.f32 %v684, %v185
    %v686 = vadd.f32 %v680, %v685
    %v687 = vlaneseq
    %v688 = vshrl.u32 %v687, 7
    %v689 = vsub.s32 6, %v688
    %v690 = vrot.slane %v651, %v689
    %v691 = vmul.f32 %v690, %v193
    %v692 = vadd.f32 %v686, %v691
    %v693 = vlaneseq
    %v694 = vshrl.u32 %v693, 7
    %v695 = vsub.s32 7, %v694
    %v696 = vrot.slane %v651, %v695
    %v697 = vmul.f32 %v696, %v201
    %v698 = vadd.f32 %v692, %v697
    %v699 = vadd.f32 %v648, %v137
    %v700 = vlog2.pop %v698
    %v701 = vmul.f32 %v700, 0.6931472
    %v702 = vadd.f32 %v699, %v701
    %s703 = scalar_lea.vmem %s0, 6
    %v704 = vld [vmem:[%s703] sm:$0x1]
    %vm705 = vcmp.ne.f32.partialorder %v704, 0.0
    %v706 = vsel %vm705, 1, 0
    %v707 = vlaneseq
    %v708 = vshrl.u32 %v707, 7
    %v709 = vsub.s32 0, %v708
    %v710 = vrot.slane %v706, %v709
    %vm711 = vcmp.eq.s32.totalorder %v710, 1
    %v712 = vsel %vm711, %v702, %v639
    %s713 = scalar_lea.vmem [#allocation8], 56
    %v714 = vld [vmem:[%s713] sm:$0xff]
    %v715 = vadd.f32 %v712, %v714
    %v716 = vrot.slane %v715, 4
    %v717 = vmax.f32 %v715, %v716
    %v718 = vrot.slane %v717, 2
    %v719 = vmax.f32 %v717, %v718
    %v720 = vrot.slane %v719, 1
    %v721 = vmax.f32 %v719, %v720
    %v722 = vsub.f32 %v715, %v721
    %v723 = vmul.f32 %v722, 1.442695
    %v724 = vpow.pop %v723
    %v725 = vlaneseq
    %v726 = vshrl.u32 %v725, 7
    %v727 = vsub.s32 0, %v726
    %v728 = vrot.slane %v724, %v727
    %v729 = vmul.f32 %v728, %v145
    %v730 = vlaneseq
    %v731 = vshrl.u32 %v730, 7
    %v732 = vsub.s32 1, %v731
    %v733 = vrot.slane %v724, %v732
    %v734 = vmul.f32 %v733, %v153
    %v735 = vadd.f32 %v729, %v734
    %v736 = vlaneseq
    %v737 = vshrl.u32 %v736, 7
    %v738 = vsub.s32 2, %v737
    %v739 = vrot.slane %v724, %v738
    %v740 = vmul.f32 %v739, %v161
    %v741 = vadd.f32 %v735, %v740
    %v742 = vlaneseq
    %v743 = vshrl.u32 %v742, 7
    %v744 = vsub.s32 3, %v743
    %v745 = vrot.slane %v724, %v744
    %v746 = vmul.f32 %v745, %v169
    %v747 = vadd.f32 %v741, %v746
    %v748 = vlaneseq
    %v749 = vshrl.u32 %v748, 7
    %v750 = vsub.s32 4, %v749
    %v751 = vrot.slane %v724, %v750
    %v752 = vmul.f32 %v751, %v177
    %v753 = vadd.f32 %v747, %v752
    %v754 = vlaneseq
    %v755 = vshrl.u32 %v754, 7
    %v756 = vsub.s32 5, %v755
    %v757 = vrot.slane %v724, %v756
    %v758 = vmul.f32 %v757, %v185
    %v759 = vadd.f32 %v753, %v758
    %v760 = vlaneseq
    %v761 = vshrl.u32 %v760, 7
    %v762 = vsub.s32 6, %v761
    %v763 = vrot.slane %v724, %v762
    %v764 = vmul.f32 %v763, %v193
    %v765 = vadd.f32 %v759, %v764
    %v766 = vlaneseq
    %v767 = vshrl.u32 %v766, 7
    %v768 = vsub.s32 7, %v767
    %v769 = vrot.slane %v724, %v768
    %v770 = vmul.f32 %v769, %v201
    %v771 = vadd.f32 %v765, %v770
    %v772 = vadd.f32 %v721, %v137
    %v773 = vlog2.pop %v771
    %v774 = vmul.f32 %v773, 0.6931472
    %v775 = vadd.f32 %v772, %v774
    %s776 = scalar_lea.vmem %s0, 7
    %v777 = vld [vmem:[%s776] sm:$0x1]
    %vm778 = vcmp.ne.f32.partialorder %v777, 0.0
    %v779 = vsel %vm778, 1, 0
    %v780 = vlaneseq
    %v781 = vshrl.u32 %v780, 7
    %v782 = vsub.s32 0, %v781
    %v783 = vrot.slane %v779, %v782
    %vm784 = vcmp.eq.s32.totalorder %v783, 1
    %v785 = vsel %vm784, %v775, %v712
    %786 = vst [vmem:[#allocation2] sm:$0xff] %v785
    // Predicated region
    $region26: #{crf_forward_alg.2} parent=1 // pred_check
      %p787 = pneg %p108
    $region27: #{crf_forward_alg.2} parent=1 // pred_check_branch
      %789 = sbr.rel (%p787) target = $region29
    $region28: #{crf_forward_alg.2} parent=1 // pred_region
      %v790 = vld [vmem:[#allocation2] sm:$0xff]
      %v791 = vld [vmem:[%s2] sm:$0xff]
      %793 = vset.pattern.permute.xlu0 0
      %794 = vperm.xlu0 %793, %v791
      %v795 = vpop.permute.xlu0 %794
      %v797 = vadd.f32 %v790, %v795
      %v798 = vrot.slane %v797, 4
      %v799 = vmax.f32 %v797, %v798
      %v800 = vrot.slane %v799, 2
      %v801 = vmax.f32 %v799, %v800
      %v802 = vrot.slane %v801, 1
      %v803 = vmax.f32 %v801, %v802
      %v804 = vsub.f32 %v797, %v803
      %v805 = vmul.f32 %v804, 1.442695
      %v806 = vpow.pop %v805
      %v807 = vrot.slane %v806, 4
      %v808 = vadd.f32 %v806, %v807
      %v809 = vrot.slane %v808, 2
      %v810 = vadd.f32 %v808, %v809
      %v811 = vrot.slane %v810, 1
      %v812 = vadd.f32 %v810, %v811
      %v813 = vlog2.pop %v812
      %v814 = vmul.f32 %v813, 0.6931472
      %v815 = vadd.f32 %v803, %v814
      %816 = vst [vmem:[%s6] sm:$0x1] %v815
    $region29: #{crf_forward_alg.2} parent=1 // pred_fallthru
      _
    // Predicated region
    $region30: #{crf_forward_alg.2} parent=1 // pred_check
      _
    $region31: #{crf_forward_alg.2} parent=1 // pred_check_branch
      %818 = sbr.rel (0) target = $region33
    $region32: #{crf_forward_alg.2} parent=1 // pred_region
      _
    $region33: #{crf_forward_alg.2} parent=1 // pred_fallthru
      _
    // Predicated region
    $region34: #{crf_forward_alg.2} parent=1 // pred_check
      _
    $region35: #{crf_forward_alg.2} parent=1 // pred_check_branch
      %820 = sbr.rel (0) target = $region37
    $region36: #{crf_forward_alg.2} parent=1 // pred_region
      _
    $region37: #{crf_forward_alg.2} parent=1 // pred_fallthru
      _

</llo_original>
